<compile_context>
chip_gen: v7x
topology: tpu7x:2x2x1
jax: 0.10.0
libtpu: 0.0.40
codegen_flags: <defaults>
</compile_context>

<pallas_src>
import functools

import jax
import jax.numpy as jnp
from jax.experimental import pallas as pl
from jax.experimental.pallas import tpu as pltpu

INPUT_SIZE = 45 * 72      # 3240
HIDDEN1 = 16
HIDDEN2 = 16
OUTPUT_SIZE = 4


def policy_kernel(x_ref, w1_ref, b1_ref, w2_ref, b2_ref, w3_ref, b3_ref, out_ref,
                  *, compute_dtype):
    # x streamed at its at-rest dtype; cast in-register (VPU, hidden under DMA) right
    # before the MXU matmul instead of materializing a converted copy of x in HBM.
    x = x_ref[...]                      # (TB, 3240) f32
    if x.dtype != compute_dtype:
        x = x.astype(compute_dtype)

    # affine1 + ReLU  (MXU matmul, f32 accumulate) — dominant cost
    h1 = jnp.dot(x, w1_ref[...], preferred_element_type=jnp.float32) + b1_ref[...]
    h1 = jnp.maximum(h1, 0.0)

    # affine2 + ReLU  (tiny, kept fused; <1% of FLOPs/bytes)
    h2 = jnp.dot(h1, w2_ref[...], preferred_element_type=jnp.float32) + b2_ref[...]
    h2 = jnp.maximum(h2, 0.0)

    # affine3
    logits = jnp.dot(h2, w3_ref[...], preferred_element_type=jnp.float32) + b3_ref[...]

    # numerically stable softmax along the action axis (f32), EUP approx reciprocal
    m = jnp.max(logits, axis=-1, keepdims=True)
    e = jnp.exp(logits - m)
    s = jnp.sum(e, axis=-1, keepdims=True)
    out_ref[...] = e * pl.reciprocal(s, approx=True)


@functools.partial(jax.jit, static_argnames=("tb", "compute_dtype"))
def policy_forward(x, params, *, tb=1024, compute_dtype=jnp.bfloat16):
    """x: (B, 3240) float32 -> (B, 4) float32 softmax probabilities."""
    w1, b1, w2, b2, w3, b3 = params
    B = x.shape[0]

    # Only w1 (the single non-trivial weight, ~200 KiB) is cast to the compute dtype here;
    # the activation stream x is NOT touched in the wrapper (no extra HBM pass).
    w1 = w1.astype(compute_dtype)

    # Batch tile: multiple of 8 (sublane), capped at `tb`. No explicit padding — Pallas
    # masks the partial last block. When B > 8, cap TB at ceil(B/2) rounded up so the
    # grid has >= 2 steps and both v7x TensorCores get work.
    if B > 8:
        tb_two_steps = pl.cdiv(pl.cdiv(B, 2), 8) * 8
        TB = max(8, min(tb, tb_two_steps))
    else:
        TB = 8
    grid = (pl.cdiv(B, TB),)

    x_itemsize = jnp.dtype(x.dtype).itemsize
    w1_itemsize = jnp.dtype(compute_dtype).itemsize
    weight_bytes = (INPUT_SIZE * HIDDEN1 * w1_itemsize
                    + (HIDDEN1 * HIDDEN2 + HIDDEN2 * OUTPUT_SIZE
                       + HIDDEN1 + HIDDEN2 + OUTPUT_SIZE) * 4)
    cost = pl.CostEstimate(
        flops=2 * B * (INPUT_SIZE * HIDDEN1 + HIDDEN1 * HIDDEN2 + HIDDEN2 * OUTPUT_SIZE),
        transcendentals=B * (OUTPUT_SIZE + 1),
        bytes_accessed=B * INPUT_SIZE * x_itemsize + weight_bytes + B * OUTPUT_SIZE * 4,
    )

    kernel = functools.partial(policy_kernel, compute_dtype=compute_dtype)

    return pl.pallas_call(
        kernel,
        out_shape=jax.ShapeDtypeStruct((B, OUTPUT_SIZE), jnp.float32),
        grid=grid,
        in_specs=[
            # x: streamed per batch tile (double-buffered DMA overlaps compute)
            pl.BlockSpec((TB, INPUT_SIZE), lambda i: (i, 0)),
            # weights/biases: constant block index -> stay resident in VMEM across steps
            pl.BlockSpec((INPUT_SIZE, HIDDEN1), lambda i: (0, 0)),
            pl.BlockSpec((1, HIDDEN1), lambda i: (0, 0)),
            pl.BlockSpec((HIDDEN1, HIDDEN2), lambda i: (0, 0)),
            pl.BlockSpec((1, HIDDEN2), lambda i: (0, 0)),
            pl.BlockSpec((HIDDEN2, OUTPUT_SIZE), lambda i: (0, 0)),
            pl.BlockSpec((1, OUTPUT_SIZE), lambda i: (0, 0)),
        ],
        out_specs=pl.BlockSpec((TB, OUTPUT_SIZE), lambda i: (i, 0)),
        compiler_params=pltpu.CompilerParams(
            dimension_semantics=("parallel",),   # shards batch tiles across v7x's 2 TCs
            vmem_limit_bytes=48 * 1024 * 1024,   # fits 1024-row f32 tiles on v5e/v6e/v7x
        ),
        cost_estimate=cost,
    )(x, w1, b1, w2, b2, w3, b3)


def init_params(key):
    """Deterministic init mimicking nn.Linear default: U(-1/sqrt(fan_in), 1/sqrt(fan_in))."""
    ks = jax.random.split(key, 6)

    def lin(kw, kb, fan_in, fan_out):
        bound = 1.0 / jnp.sqrt(jnp.float32(fan_in))
        w = jax.random.uniform(kw, (fan_in, fan_out), jnp.float32, -bound, bound)
        b = jax.random.uniform(kb, (1, fan_out), jnp.float32, -bound, bound)
        return w, b

    w1, b1 = lin(ks[0], ks[1], INPUT_SIZE, HIDDEN1)
    w2, b2 = lin(ks[2], ks[3], HIDDEN1, HIDDEN2)
    w3, b3 = lin(ks[4], ks[5], HIDDEN2, OUTPUT_SIZE)
    return (w1, b1, w2, b2, w3, b3)


def reference_forward(x, params):
    w1, b1, w2, b2, w3, b3 = params
    h1 = jnp.maximum(x @ w1 + b1, 0.0)
    h2 = jnp.maximum(h1 @ w2 + b2, 0.0)
    logits = h2 @ w3 + b3
    return jax.nn.softmax(logits, axis=-1)


# TODO(synk): Policy.saved_actions / Policy.rewards are host-side Python bookkeeping for the
# REINFORCE loop, not tensor ops; they have no kernel equivalent.

if __name__ == "__main__":
    key = jax.random.PRNGKey(0)
    k_params, k_x, k_x2 = jax.random.split(key, 3)

    params = init_params(k_params)

    # Primary check: small batch (single, partial grid block).
    batch = 2
    x = jax.random.uniform(k_x, (batch, INPUT_SIZE), jnp.float32)  # flattened "pixel" input
    ref = reference_forward(x, params)

    out_bf16 = jax.block_until_ready(policy_forward(x, params))                        # production path
    out_f32 = jax.block_until_ready(policy_forward(x, params, compute_dtype=jnp.float32))  # tight check

    assert out_bf16.shape == (batch, OUTPUT_SIZE)
    assert out_f32.shape == (batch, OUTPUT_SIZE)
    assert jnp.allclose(out_f32, ref, atol=1e-3, rtol=1e-3)
    assert jnp.allclose(out_bf16, ref, atol=2e-2, rtol=2e-2)
    assert jnp.allclose(jnp.sum(out_f32, axis=-1), 1.0, atol=2e-3)
    assert jnp.allclose(jnp.sum(out_bf16, axis=-1), 1.0, atol=2e-3)

    # Secondary check: multi-step grid with a masked partial last block (B=20, TB=16 -> 2 steps).
    batch2 = 20
    x2 = jax.random.uniform(k_x2, (batch2, INPUT_SIZE), jnp.float32)
    ref2 = reference_forward(x2, params)
    out2 = jax.block_until_ready(policy_forward(x2, params, tb=16))
    assert out2.shape == (batch2, OUTPUT_SIZE)
    assert jnp.allclose(out2, ref2, atol=2e-2, rtol=2e-2)

    print("KERNEL_OK")
</pallas_src>

<mosaic_0001>
module attributes {stable_mosaic.version = 11 : i64} {
  func.func @policy_kernel(%arg0: i32, %arg1: memref<8x3240xf32, #tpu.memory_space<vmem>>, %arg2: memref<3240x16xbf16, #tpu.memory_space<vmem>>, %arg3: memref<1x16xf32, #tpu.memory_space<vmem>>, %arg4: memref<16x16xf32, #tpu.memory_space<vmem>>, %arg5: memref<1x16xf32, #tpu.memory_space<vmem>>, %arg6: memref<16x4xf32, #tpu.memory_space<vmem>>, %arg7: memref<1x4xf32, #tpu.memory_space<vmem>>, %arg8: memref<8x4xf32, #tpu.memory_space<vmem>>) attributes {dimension_semantics = [#tpu.dimension_semantics<parallel>], iteration_bounds = array<i64: 1>, scalar_prefetch = 0 : i64, scratch_operands = 0 : i64, tpu.core_type = #tpu.core_type<tc>, window_params = [{transform_indices = @transform_0, window_bounds = array<i64: 8, 3240>}, {pipeline_mode = #tpu.pipeline_mode<synchronous>, transform_indices = @transform_1, window_bounds = array<i64: 3240, 16>}, {pipeline_mode = #tpu.pipeline_mode<synchronous>, transform_indices = @transform_2, window_bounds = array<i64: 1, 16>}, {pipeline_mode = #tpu.pipeline_mode<synchronous>, transform_indices = @transform_3, window_bounds = array<i64: 16, 16>}, {pipeline_mode = #tpu.pipeline_mode<synchronous>, transform_indices = @transform_4, window_bounds = array<i64: 1, 16>}, {pipeline_mode = #tpu.pipeline_mode<synchronous>, transform_indices = @transform_5, window_bounds = array<i64: 16, 4>}, {pipeline_mode = #tpu.pipeline_mode<synchronous>, transform_indices = @transform_6, window_bounds = array<i64: 1, 4>}, {transform_indices = @transform_7, window_bounds = array<i64: 8, 4>}]} {
    %c0 = arith.constant 0 : index
    %c0_0 = arith.constant 0 : index
    %0 = vector.load %arg1[%c0, %c0_0] : memref<8x3240xf32, #tpu.memory_space<vmem>>, vector<8x3240xf32>
    %1 = arith.truncf %0 : vector<8x3240xf32> to vector<8x3240xbf16>
    %c0_1 = arith.constant 0 : index
    %c0_2 = arith.constant 0 : index
    %2 = vector.load %arg2[%c0_1, %c0_2] : memref<3240x16xbf16, #tpu.memory_space<vmem>>, vector<3240x16xbf16>
    %cst = arith.constant dense<0.000000e+00> : vector<8x16xf32>
    %3 = tpu.matmul %1, %2, %cst {dimension_numbers = #tpu.dot_dimension_numbers<[1], [0], [0], [1], [0, 0, 1, 1], [], []>} : vector<8x3240xbf16>, vector<3240x16xbf16>, vector<8x16xf32> -> vector<8x16xf32>
    %c0_3 = arith.constant 0 : index
    %c0_4 = arith.constant 0 : index
    %4 = vector.load %arg3[%c0_3, %c0_4] : memref<1x16xf32, #tpu.memory_space<vmem>>, vector<1x16xf32>
    %5 = vector.broadcast %4 : vector<1x16xf32> to vector<8x16xf32>
    %6 = arith.addf %3, %5 : vector<8x16xf32>
    %cst_5 = arith.constant 0.000000e+00 : f32
    %7 = vector.broadcast %cst_5 : f32 to vector<8x16xf32>
    %8 = arith.maximumf %6, %7 : vector<8x16xf32>
    %c0_6 = arith.constant 0 : index
    %c0_7 = arith.constant 0 : index
    %9 = vector.load %arg4[%c0_6, %c0_7] : memref<16x16xf32, #tpu.memory_space<vmem>>, vector<16x16xf32>
    %cst_8 = arith.constant dense<0.000000e+00> : vector<8x16xf32>
    %10 = tpu.matmul %8, %9, %cst_8 {dimension_numbers = #tpu.dot_dimension_numbers<[1], [0], [0], [1], [0, 0, 1, 1], [], []>} : vector<8x16xf32>, vector<16x16xf32>, vector<8x16xf32> -> vector<8x16xf32>
    %c0_9 = arith.constant 0 : index
    %c0_10 = arith.constant 0 : index
    %11 = vector.load %arg5[%c0_9, %c0_10] : memref<1x16xf32, #tpu.memory_space<vmem>>, vector<1x16xf32>
    %12 = vector.broadcast %11 : vector<1x16xf32> to vector<8x16xf32>
    %13 = arith.addf %10, %12 : vector<8x16xf32>
    %cst_11 = arith.constant 0.000000e+00 : f32
    %14 = vector.broadcast %cst_11 : f32 to vector<8x16xf32>
    %15 = arith.maximumf %13, %14 : vector<8x16xf32>
    %c0_12 = arith.constant 0 : index
    %c0_13 = arith.constant 0 : index
    %16 = vector.load %arg6[%c0_12, %c0_13] : memref<16x4xf32, #tpu.memory_space<vmem>>, vector<16x4xf32>
    %cst_14 = arith.constant dense<0.000000e+00> : vector<8x4xf32>
    %17 = tpu.matmul %15, %16, %cst_14 {dimension_numbers = #tpu.dot_dimension_numbers<[1], [0], [0], [1], [0, 0, 1, 1], [], []>} : vector<8x16xf32>, vector<16x4xf32>, vector<8x4xf32> -> vector<8x4xf32>
    %c0_15 = arith.constant 0 : index
    %c0_16 = arith.constant 0 : index
    %18 = vector.load %arg7[%c0_15, %c0_16] : memref<1x4xf32, #tpu.memory_space<vmem>>, vector<1x4xf32>
    %19 = vector.broadcast %18 : vector<1x4xf32> to vector<8x4xf32>
    %20 = arith.addf %17, %19 : vector<8x4xf32>
    %cst_17 = arith.constant dense<0xFF800000> : vector<8xf32>
    %21 = vector.multi_reduction <maximumf>, %20, %cst_17 [1] : vector<8x4xf32> to vector<8xf32>
    %22 = vector.shape_cast %21 : vector<8xf32> to vector<8x1xf32>
    %23 = vector.broadcast %22 : vector<8x1xf32> to vector<8x4xf32>
    %24 = arith.subf %20, %23 : vector<8x4xf32>
    %25 = math.exp %24 : vector<8x4xf32>
    %cst_18 = arith.constant dense<0.000000e+00> : vector<8xf32>
    %26 = vector.multi_reduction <add>, %25, %cst_18 [1] : vector<8x4xf32> to vector<8xf32>
    %27 = vector.shape_cast %26 : vector<8xf32> to vector<8x1xf32>
    %28 = tpu.reciprocal %27 {approx = true} : vector<8x1xf32> -> vector<8x1xf32>
    %29 = vector.broadcast %28 : vector<8x1xf32> to vector<8x4xf32>
    %30 = arith.mulf %25, %29 : vector<8x4xf32>
    %c0_19 = arith.constant 0 : index
    %c0_20 = arith.constant 0 : index
    %31 = vector.load %arg8[%c0_19, %c0_20] : memref<8x4xf32, #tpu.memory_space<vmem>>, vector<8x4xf32>
    tpu.vector_store %arg8[%c0_19, %c0_20], %30 {strides = array<i32>} : memref<8x4xf32, #tpu.memory_space<vmem>>, vector<8x4xf32>,
    return
  }
  func.func @transform_0(%arg0: i32) -> (i32, i32) {
    %c0_i32 = arith.constant 0 : i32
    %c0_i32_0 = arith.constant 0 : i32
    return %arg0, %c0_i32 : i32, i32
  }
  func.func @transform_1(%arg0: i32) -> (i32, i32) {
    %c0_i32 = arith.constant 0 : i32
    %c0_i32_0 = arith.constant 0 : i32
    %c0_i32_1 = arith.constant 0 : i32
    return %c0_i32, %c0_i32_0 : i32, i32
  }
  func.func @transform_2(%arg0: i32) -> (i32, i32) {
    %c0_i32 = arith.constant 0 : i32
    %c0_i32_0 = arith.constant 0 : i32
    %c0_i32_1 = arith.constant 0 : i32
    return %c0_i32, %c0_i32_0 : i32, i32
  }
  func.func @transform_3(%arg0: i32) -> (i32, i32) {
    %c0_i32 = arith.constant 0 : i32
    %c0_i32_0 = arith.constant 0 : i32
    %c0_i32_1 = arith.constant 0 : i32
    return %c0_i32, %c0_i32_0 : i32, i32
  }
  func.func @transform_4(%arg0: i32) -> (i32, i32) {
    %c0_i32 = arith.constant 0 : i32
    %c0_i32_0 = arith.constant 0 : i32
    %c0_i32_1 = arith.constant 0 : i32
    return %c0_i32, %c0_i32_0 : i32, i32
  }
  func.func @transform_5(%arg0: i32) -> (i32, i32) {
    %c0_i32 = arith.constant 0 : i32
    %c0_i32_0 = arith.constant 0 : i32
    %c0_i32_1 = arith.constant 0 : i32
    return %c0_i32, %c0_i32_0 : i32, i32
  }
  func.func @transform_6(%arg0: i32) -> (i32, i32) {
    %c0_i32 = arith.constant 0 : i32
    %c0_i32_0 = arith.constant 0 : i32
    %c0_i32_1 = arith.constant 0 : i32
    return %c0_i32, %c0_i32_0 : i32, i32
  }
  func.func @transform_7(%arg0: i32) -> (i32, i32) {
    %c0_i32 = arith.constant 0 : i32
    %c0_i32_0 = arith.constant 0 : i32
    return %arg0, %c0_i32 : i32, i32
  }
}

</mosaic_0001>

<llo_original>
// kernel: policy_forward.1
$region0: #{policy_forward.1}
  #allocation0 [shape = 'u32[]', space=smem, size = 0x4, offset = 0x4, fixed_abs, tag = 'smem constant byte address 0x4 - core index']
  #allocation1 [shape = 'u32[144,128]{1,0:T(1,128)}', space=vmem, size = 0x12000, scoped, tag = 'internal scratch']
  %s0 = inlined_call_operand.vmem [shape: f32[2,3240], index: 0, kind: input, shape index: {}]
  %s1 = inlined_call_operand.vmem [shape: bf16[3240,16], index: 1, kind: input, shape index: {}]
  %s2 = inlined_call_operand.vmem [shape: f32[1,16], index: 2, kind: input, shape index: {}]
  %s3 = inlined_call_operand.vmem [shape: f32[16,16], index: 3, kind: input, shape index: {}]
  %s4 = inlined_call_operand.vmem [shape: f32[1,16], index: 4, kind: input, shape index: {}]
  %s5 = inlined_call_operand.vmem [shape: f32[16,4], index: 5, kind: input, shape index: {}]
  %s6 = inlined_call_operand.vmem [shape: f32[1,4], index: 6, kind: input, shape index: {}]
  %s7 = inlined_call_operand.hbm [shape: f32[2,4], index: 7, kind: output, shape index: {}]
  %s8 = sld [smem:[#allocation0]]
  $region38: #{policy_forward.1} parent=0
    _
  %s10 = ssub.s32 1, %s8
  %s11 = scalar_select 0, %s10, %s8
  $region1: #{policy_forward.1} parent=0
    #allocation2 [shape = 'u8[4096]{0}', space=vmem, size = 0x1000, scoped, tag = 'output window, operand 0, single buffered']
    #allocation3 [shape = 's32[1]{0}', space=sflag, size = 0x4, scoped, tag = 'scoped memory for policy_forward.1']
    %12 = vsyncpa [#allocation3], 0
    // Predicated region
    $region2: #{policy_forward.1} parent=1 // pred_check
      _
    $region3: #{policy_forward.1} parent=1 // pred_check_branch
      %14 = sbr.rel (0) target = $region5
    $region4: #{policy_forward.1} parent=1 // pred_region
      _
    $region5: #{policy_forward.1} parent=1 // pred_fallthru
      _
    // Predicated region
    $region6: #{policy_forward.1} parent=1 // pred_check
      _
    $region7: #{policy_forward.1} parent=1 // pred_check_branch
      %16 = sbr.rel (0) target = $region9
    $region8: #{policy_forward.1} parent=1 // pred_region
      _
    $region9: #{policy_forward.1} parent=1 // pred_fallthru
      _
    // Predicated region
    $region10: #{policy_forward.1} parent=1 // pred_check
      _
    $region11: #{policy_forward.1} parent=1 // pred_check_branch
      %18 = sbr.rel (0) target = $region13
    $region12: #{policy_forward.1} parent=1 // pred_region
      _
    $region13: #{policy_forward.1} parent=1 // pred_fallthru
      _
    // Predicated region
    $region14: #{policy_forward.1} parent=1 // pred_check
      _
    $region15: #{policy_forward.1} parent=1 // pred_check_branch
      %20 = sbr.rel (0) target = $region17
    $region16: #{policy_forward.1} parent=1 // pred_region
      _
    $region17: #{policy_forward.1} parent=1 // pred_fallthru
      _
    // Predicated region
    $region18: #{policy_forward.1} parent=1 // pred_check
      _
    $region19: #{policy_forward.1} parent=1 // pred_check_branch
      %22 = sbr.rel (0) target = $region21
    $region20: #{policy_forward.1} parent=1 // pred_region
      _
    $region21: #{policy_forward.1} parent=1 // pred_fallthru
      _
    // Predicated region
    $region22: #{policy_forward.1} parent=1 // pred_check
      _
    $region23: #{policy_forward.1} parent=1 // pred_check_branch
      %24 = sbr.rel (0) target = $region25
    $region24: #{policy_forward.1} parent=1 // pred_region
      _
    $region25: #{policy_forward.1} parent=1 // pred_fallthru
      _
    // Predicated region
    $region26: #{policy_forward.1} parent=1 // pred_check
      _
    $region27: #{policy_forward.1} parent=1 // pred_check_branch
      %26 = sbr.rel (0) target = $region29
    $region28: #{policy_forward.1} parent=1 // pred_region
      _
    $region29: #{policy_forward.1} parent=1 // pred_fallthru
      _
    %v28 = vld [vmem:[%s0] sm:$0xff]
    %v29 = vld [vmem:[%s0 + $0x8] sm:$0xff]
    %v30 = vld [vmem:[%s0 + $0x10] sm:$0xff]
    %v31 = vld [vmem:[%s0 + $0x18] sm:$0xff]
    %v32 = vld [vmem:[%s0 + $0x20] sm:$0xff]
    %v33 = vld [vmem:[%s0 + $0x28] sm:$0xff]
    %v34 = vld [vmem:[%s0 + $0x30] sm:$0xf]
    %v35 = vld [vmem:[%s0 + $0x34] sm:$0xff]
    %v36 = vld [vmem:[%s0 + $0x3c] sm:$0xff]
    %v37 = vld [vmem:[%s0 + $0x44] sm:$0xff]
    %v38 = vld [vmem:[%s0 + $0x4c] sm:$0xff]
    %v39 = vld [vmem:[%s0 + $0x54] sm:$0xff]
    %v40 = vld [vmem:[%s0 + $0x5c] sm:$0xff]
    %v41 = vld [vmem:[%s0 + $0x64] sm:$0xf]
    %v42 = vld [vmem:[%s0 + $0x68] sm:$0xff]
    %v43 = vld [vmem:[%s0 + $0x70] sm:$0xff]
    %v44 = vld [vmem:[%s0 + $0x78] sm:$0xff]
    %v45 = vld [vmem:[%s0 + $0x80] sm:$0xff]
    %v46 = vld [vmem:[%s0 + $0x88] sm:$0xff]
    %v47 = vld [vmem:[%s0 + $0x90] sm:$0xff]
    %v48 = vld [vmem:[%s0 + $0x98] sm:$0xf]
    %v49 = vld [vmem:[%s0 + $0x9c] sm:$0xff]
    %v50 = vld [vmem:[%s0 + $0xa4] sm:$0xff]
    %v51 = vld [vmem:[%s0 + $0xac] sm:$0xff]
    %v52 = vld [vmem:[%s0 + $0xb4] sm:$0xff]
    %v53 = vld [vmem:[%s0 + $0xbc] sm:$0xff]
    %v54 = vld [vmem:[%s0 + $0xc4] sm:$0xff]
    %v55 = vld [vmem:[%s0 + $0xcc] sm:$0xf]
    %v84 = vcombine.low %v28, %v35
    %v85 = vcombine.high %v28, %v35
    %v86 = vcombine.low %v42, %v49
    %v87 = vcombine.high %v42, %v49
    %v89 = vunpack.c.l.s4 1983009808
    %v90 = vunpack.c.0.s8 %v89
    %v91 = vlaneseq
    %v92 = vshrl.u32 %v91, 7
    %v93 = vsub.s32 %v90, %v92
    %v94 = vrot.slane %v84, %v93
    %v96 = vunpack.c.l.s4 1983009808
    %v97 = vunpack.c.0.s8 %v96
    %v98 = vlaneseq
    %v99 = vshrl.u32 %v98, 7
    %v100 = vsub.s32 %v97, %v99
    %v101 = vrot.slane %v85, %v100
    %v103 = vunpack.c.l.s4 1983009808
    %v104 = vunpack.c.0.s8 %v103
    %v105 = vlaneseq
    %v106 = vshrl.u32 %v105, 7
    %v107 = vsub.s32 %v104, %v106
    %v108 = vrot.slane %v86, %v107
    %v110 = vunpack.c.l.s4 1983009808
    %v111 = vunpack.c.0.s8 %v110
    %v112 = vlaneseq
    %v113 = vshrl.u32 %v112, 7
    %v114 = vsub.s32 %v111, %v113
    %v115 = vrot.slane %v87, %v114
    %v116 = vcombine.low %v94, %v108
    %v117 = vcombine.high %v94, %v108
    %v118 = vcombine.low %v101, %v115
    %v119 = vcombine.high %v101, %v115
    %v120 = vcombine.low %v29, %v36
    %v121 = vcombine.high %v29, %v36
    %v122 = vcombine.low %v43, %v50
    %v123 = vcombine.high %v43, %v50
    %v125 = vunpack.c.l.s4 1983009808
    %v126 = vunpack.c.0.s8 %v125
    %v127 = vlaneseq
    %v128 = vshrl.u32 %v127, 7
    %v129 = vsub.s32 %v126, %v128
    %v130 = vrot.slane %v120, %v129
    %v132 = vunpack.c.l.s4 1983009808
    %v133 = vunpack.c.0.s8 %v132
    %v134 = vlaneseq
    %v135 = vshrl.u32 %v134, 7
    %v136 = vsub.s32 %v133, %v135
    %v137 = vrot.slane %v121, %v136
    %v139 = vunpack.c.l.s4 1983009808
    %v140 = vunpack.c.0.s8 %v139
    %v141 = vlaneseq
    %v142 = vshrl.u32 %v141, 7
    %v143 = vsub.s32 %v140, %v142
    %v144 = vrot.slane %v122, %v143
    %v146 = vunpack.c.l.s4 1983009808
    %v147 = vunpack.c.0.s8 %v146
    %v148 = vlaneseq
    %v149 = vshrl.u32 %v148, 7
    %v150 = vsub.s32 %v147, %v149
    %v151 = vrot.slane %v123, %v150
    %v152 = vcombine.low %v130, %v144
    %v153 = vcombine.high %v130, %v144
    %v154 = vcombine.low %v137, %v151
    %v155 = vcombine.high %v137, %v151
    %v156 = vcombine.low %v30, %v37
    %v157 = vcombine.high %v30, %v37
    %v158 = vcombine.low %v44, %v51
    %v159 = vcombine.high %v44, %v51
    %v161 = vunpack.c.l.s4 1983009808
    %v162 = vunpack.c.0.s8 %v161
    %v163 = vlaneseq
    %v164 = vshrl.u32 %v163, 7
    %v165 = vsub.s32 %v162, %v164
    %v166 = vrot.slane %v156, %v165
    %v168 = vunpack.c.l.s4 1983009808
    %v169 = vunpack.c.0.s8 %v168
    %v170 = vlaneseq
    %v171 = vshrl.u32 %v170, 7
    %v172 = vsub.s32 %v169, %v171
    %v173 = vrot.slane %v157, %v172
    %v175 = vunpack.c.l.s4 1983009808
    %v176 = vunpack.c.0.s8 %v175
    %v177 = vlaneseq
    %v178 = vshrl.u32 %v177, 7
    %v179 = vsub.s32 %v176, %v178
    %v180 = vrot.slane %v158, %v179
    %v182 = vunpack.c.l.s4 1983009808
    %v183 = vunpack.c.0.s8 %v182
    %v184 = vlaneseq
    %v185 = vshrl.u32 %v184, 7
    %v186 = vsub.s32 %v183, %v185
    %v187 = vrot.slane %v159, %v186
    %v188 = vcombine.low %v166, %v180
    %v189 = vcombine.high %v166, %v180
    %v190 = vcombine.low %v173, %v187
    %v191 = vcombine.high %v173, %v187
    %v192 = vcombine.low %v31, %v38
    %v193 = vcombine.high %v31, %v38
    %v194 = vcombine.low %v45, %v52
    %v195 = vcombine.high %v45, %v52
    %v197 = vunpack.c.l.s4 1983009808
    %v198 = vunpack.c.0.s8 %v197
    %v199 = vlaneseq
    %v200 = vshrl.u32 %v199, 7
    %v201 = vsub.s32 %v198, %v200
    %v202 = vrot.slane %v192, %v201
    %v204 = vunpack.c.l.s4 1983009808
    %v205 = vunpack.c.0.s8 %v204
    %v206 = vlaneseq
    %v207 = vshrl.u32 %v206, 7
    %v208 = vsub.s32 %v205, %v207
    %v209 = vrot.slane %v193, %v208
    %v211 = vunpack.c.l.s4 1983009808
    %v212 = vunpack.c.0.s8 %v211
    %v213 = vlaneseq
    %v214 = vshrl.u32 %v213, 7
    %v215 = vsub.s32 %v212, %v214
    %v216 = vrot.slane %v194, %v215
    %v218 = vunpack.c.l.s4 1983009808
    %v219 = vunpack.c.0.s8 %v218
    %v220 = vlaneseq
    %v221 = vshrl.u32 %v220, 7
    %v222 = vsub.s32 %v219, %v221
    %v223 = vrot.slane %v195, %v222
    %v224 = vcombine.low %v202, %v216
    %v225 = vcombine.high %v202, %v216
    %v226 = vcombine.low %v209, %v223
    %v227 = vcombine.high %v209, %v223
    %v228 = vcombine.low %v32, %v39
    %v229 = vcombine.high %v32, %v39
    %v230 = vcombine.low %v46, %v53
    %v231 = vcombine.high %v46, %v53
    %v233 = vunpack.c.l.s4 1983009808
    %v234 = vunpack.c.0.s8 %v233
    %v235 = vlaneseq
    %v236 = vshrl.u32 %v235, 7
    %v237 = vsub.s32 %v234, %v236
    %v238 = vrot.slane %v228, %v237
    %v240 = vunpack.c.l.s4 1983009808
    %v241 = vunpack.c.0.s8 %v240
    %v242 = vlaneseq
    %v243 = vshrl.u32 %v242, 7
    %v244 = vsub.s32 %v241, %v243
    %v245 = vrot.slane %v229, %v244
    %v247 = vunpack.c.l.s4 1983009808
    %v248 = vunpack.c.0.s8 %v247
    %v249 = vlaneseq
    %v250 = vshrl.u32 %v249, 7
    %v251 = vsub.s32 %v248, %v250
    %v252 = vrot.slane %v230, %v251
    %v254 = vunpack.c.l.s4 1983009808
    %v255 = vunpack.c.0.s8 %v254
    %v256 = vlaneseq
    %v257 = vshrl.u32 %v256, 7
    %v258 = vsub.s32 %v255, %v257
    %v259 = vrot.slane %v231, %v258
    %v260 = vcombine.low %v238, %v252
    %v261 = vcombine.high %v238, %v252
    %v262 = vcombine.low %v245, %v259
    %v263 = vcombine.high %v245, %v259
    %v264 = vcombine.low %v33, %v40
    %v265 = vcombine.high %v33, %v40
    %v266 = vcombine.low %v47, %v54
    %v267 = vcombine.high %v47, %v54
    %v269 = vunpack.c.l.s4 1983009808
    %v270 = vunpack.c.0.s8 %v269
    %v271 = vlaneseq
    %v272 = vshrl.u32 %v271, 7
    %v273 = vsub.s32 %v270, %v272
    %v274 = vrot.slane %v264, %v273
    %v276 = vunpack.c.l.s4 1983009808
    %v277 = vunpack.c.0.s8 %v276
    %v278 = vlaneseq
    %v279 = vshrl.u32 %v278, 7
    %v280 = vsub.s32 %v277, %v279
    %v281 = vrot.slane %v265, %v280
    %v283 = vunpack.c.l.s4 1983009808
    %v284 = vunpack.c.0.s8 %v283
    %v285 = vlaneseq
    %v286 = vshrl.u32 %v285, 7
    %v287 = vsub.s32 %v284, %v286
    %v288 = vrot.slane %v266, %v287
    %v290 = vunpack.c.l.s4 1983009808
    %v291 = vunpack.c.0.s8 %v290
    %v292 = vlaneseq
    %v293 = vshrl.u32 %v292, 7
    %v294 = vsub.s32 %v291, %v293
    %v295 = vrot.slane %v267, %v294
    %v296 = vcombine.low %v274, %v288
    %v297 = vcombine.high %v274, %v288
    %v298 = vcombine.low %v281, %v295
    %v299 = vcombine.high %v281, %v295
    %v300 = vcombine.low %v34, %v41
    %v301 = vcombine.low %v48, %v55
    %v303 = vunpack.c.l.s4 1983009808
    %v304 = vunpack.c.0.s8 %v303
    %v305 = vlaneseq
    %v306 = vshrl.u32 %v305, 7
    %v307 = vsub.s32 %v304, %v306
    %v308 = vrot.slane %v300, %v307
    %v310 = vunpack.c.l.s4 1983009808
    %v311 = vunpack.c.0.s8 %v310
    %v312 = vlaneseq
    %v313 = vshrl.u32 %v312, 7
    %v314 = vsub.s32 %v311, %v313
    %v315 = vrot.slane %v301, %v314
    %v316 = vcombine.low %v308, %v315
    %v317 = vcombine.high %v308, %v315
    %v344 = vpack.c.bf16 %v116, %v116
    %v345 = vpack.c.bf16 %v117, %v117
    %v346 = vpack.c.bf16 %v118, %v118
    %v347 = vpack.c.bf16 %v119, %v119
    %v348 = vpack.c.bf16 %v152, %v152
    %v349 = vpack.c.bf16 %v153, %v153
    %v350 = vpack.c.bf16 %v154, %v154
    %v351 = vpack.c.bf16 %v155, %v155
    %v352 = vpack.c.bf16 %v188, %v188
    %v353 = vpack.c.bf16 %v189, %v189
    %v354 = vpack.c.bf16 %v190, %v190
    %v355 = vpack.c.bf16 %v191, %v191
    %v356 = vpack.c.bf16 %v224, %v224
    %v357 = vpack.c.bf16 %v225, %v225
    %v358 = vpack.c.bf16 %v226, %v226
    %v359 = vpack.c.bf16 %v227, %v227
    %v360 = vpack.c.bf16 %v260, %v260
    %v361 = vpack.c.bf16 %v261, %v261
    %v362 = vpack.c.bf16 %v262, %v262
    %v363 = vpack.c.bf16 %v263, %v263
    %v364 = vpack.c.bf16 %v296, %v296
    %v365 = vpack.c.bf16 %v297, %v297
    %v366 = vpack.c.bf16 %v298, %v298
    %v367 = vpack.c.bf16 %v299, %v299
    %v368 = vpack.c.bf16 %v316, %v316
    %v369 = vpack.c.bf16 %v317, %v317
    %v370 = vld [vmem:[%s1] sm:$0xf]
    %v371 = vld [vmem:[%s1 + $0x4] sm:$0xf]
    %v372 = vld [vmem:[%s1 + $0x8] sm:$0xf]
    %v373 = vld [vmem:[%s1 + $0xc] sm:$0xf]
    %v374 = vld [vmem:[%s1 + $0x10] sm:$0xf]
    %v375 = vld [vmem:[%s1 + $0x14] sm:$0xf]
    %v376 = vld [vmem:[%s1 + $0x18] sm:$0xf]
    %v377 = vld [vmem:[%s1 + $0x1c] sm:$0xf]
    %v378 = vld [vmem:[%s1 + $0x20] sm:$0xf]
    %v379 = vld [vmem:[%s1 + $0x24] sm:$0xf]
    %v380 = vld [vmem:[%s1 + $0x28] sm:$0xf]
    %v381 = vld [vmem:[%s1 + $0x2c] sm:$0xf]
    %v382 = vld [vmem:[%s1 + $0x30] sm:$0xf]
    %v383 = vld [vmem:[%s1 + $0x34] sm:$0xf]
    %v384 = vld [vmem:[%s1 + $0x38] sm:$0xf]
    %v385 = vld [vmem:[%s1 + $0x3c] sm:$0xf]
    %v386 = vld [vmem:[%s1 + $0x40] sm:$0xf]
    %v387 = vld [vmem:[%s1 + $0x44] sm:$0xf]
    %v388 = vld [vmem:[%s1 + $0x48] sm:$0xf]
    %v389 = vld [vmem:[%s1 + $0x4c] sm:$0xf]
    %v390 = vld [vmem:[%s1 + $0x50] sm:$0xf]
    %v391 = vld [vmem:[%s1 + $0x54] sm:$0xf]
    %v392 = vld [vmem:[%s1 + $0x58] sm:$0xf]
    %v393 = vld [vmem:[%s1 + $0x5c] sm:$0xf]
    %v394 = vld [vmem:[%s1 + $0x60] sm:$0xf]
    %v395 = vld [vmem:[%s1 + $0x64] sm:$0xf]
    %v396 = vld [vmem:[%s1 + $0x68] sm:$0xf]
    %v397 = vld [vmem:[%s1 + $0x6c] sm:$0xf]
    %v398 = vld [vmem:[%s1 + $0x70] sm:$0xf]
    %v399 = vld [vmem:[%s1 + $0x74] sm:$0xf]
    %v400 = vld [vmem:[%s1 + $0x78] sm:$0xf]
    %v401 = vld [vmem:[%s1 + $0x7c] sm:$0xf]
    %v402 = vld [vmem:[%s1 + $0x80] sm:$0xf]
    %v403 = vld [vmem:[%s1 + $0x84] sm:$0xf]
    %v404 = vld [vmem:[%s1 + $0x88] sm:$0xf]
    %v405 = vld [vmem:[%s1 + $0x8c] sm:$0xf]
    %v406 = vld [vmem:[%s1 + $0x90] sm:$0xf]
    %v407 = vld [vmem:[%s1 + $0x94] sm:$0xf]
    %v408 = vld [vmem:[%s1 + $0x98] sm:$0xf]
    %v409 = vld [vmem:[%s1 + $0x9c] sm:$0xf]
    %v410 = vld [vmem:[%s1 + $0xa0] sm:$0xf]
    %v411 = vld [vmem:[%s1 + $0xa4] sm:$0xf]
    %v412 = vld [vmem:[%s1 + $0xa8] sm:$0xf]
    %v413 = vld [vmem:[%s1 + $0xac] sm:$0xf]
    %v414 = vld [vmem:[%s1 + $0xb0] sm:$0xf]
    %v415 = vld [vmem:[%s1 + $0xb4] sm:$0xf]
    %v416 = vld [vmem:[%s1 + $0xb8] sm:$0xf]
    %v417 = vld [vmem:[%s1 + $0xbc] sm:$0xf]
    %v418 = vld [vmem:[%s1 + $0xc0] sm:$0xf]
    %v419 = vld [vmem:[%s1 + $0xc4] sm:$0xf]
    %v420 = vld [vmem:[%s1 + $0xc8] sm:$0xf]
    %v421 = vld [vmem:[%s1 + $0xcc] sm:$0xf]
    %v422 = vld [vmem:[%s1 + $0xd0] sm:$0xf]
    %v423 = vld [vmem:[%s1 + $0xd4] sm:$0xf]
    %v424 = vld [vmem:[%s1 + $0xd8] sm:$0xf]
    %v425 = vld [vmem:[%s1 + $0xdc] sm:$0xf]
    %v426 = vld [vmem:[%s1 + $0xe0] sm:$0xf]
    %v427 = vld [vmem:[%s1 + $0xe4] sm:$0xf]
    %v428 = vld [vmem:[%s1 + $0xe8] sm:$0xf]
    %v429 = vld [vmem:[%s1 + $0xec] sm:$0xf]
    %v430 = vld [vmem:[%s1 + $0xf0] sm:$0xf]
    %v431 = vld [vmem:[%s1 + $0xf4] sm:$0xf]
    %v432 = vld [vmem:[%s1 + $0xf8] sm:$0xf]
    %v433 = vld [vmem:[%s1 + $0xfc] sm:$0xf]
    %v434 = vld [vmem:[%s1 + $0x100] sm:$0xf]
    %v435 = vld [vmem:[%s1 + $0x104] sm:$0xf]
    %v436 = vld [vmem:[%s1 + $0x108] sm:$0xf]
    %v437 = vld [vmem:[%s1 + $0x10c] sm:$0xf]
    %v438 = vld [vmem:[%s1 + $0x110] sm:$0xf]
    %v439 = vld [vmem:[%s1 + $0x114] sm:$0xf]
    %v440 = vld [vmem:[%s1 + $0x118] sm:$0xf]
    %v441 = vld [vmem:[%s1 + $0x11c] sm:$0xf]
    %v442 = vld [vmem:[%s1 + $0x120] sm:$0xf]
    %v443 = vld [vmem:[%s1 + $0x124] sm:$0xf]
    %v444 = vld [vmem:[%s1 + $0x128] sm:$0xf]
    %v445 = vld [vmem:[%s1 + $0x12c] sm:$0xf]
    %v446 = vld [vmem:[%s1 + $0x130] sm:$0xf]
    %v447 = vld [vmem:[%s1 + $0x134] sm:$0xf]
    %v448 = vld [vmem:[%s1 + $0x138] sm:$0xf]
    %v449 = vld [vmem:[%s1 + $0x13c] sm:$0xf]
    %v450 = vld [vmem:[%s1 + $0x140] sm:$0xf]
    %v451 = vld [vmem:[%s1 + $0x144] sm:$0xf]
    %v452 = vld [vmem:[%s1 + $0x148] sm:$0xf]
    %v453 = vld [vmem:[%s1 + $0x14c] sm:$0xf]
    %v454 = vld [vmem:[%s1 + $0x150] sm:$0xf]
    %v455 = vld [vmem:[%s1 + $0x154] sm:$0xf]
    %v456 = vld [vmem:[%s1 + $0x158] sm:$0xf]
    %v457 = vld [vmem:[%s1 + $0x15c] sm:$0xf]
    %v458 = vld [vmem:[%s1 + $0x160] sm:$0xf]
    %v459 = vld [vmem:[%s1 + $0x164] sm:$0xf]
    %v460 = vld [vmem:[%s1 + $0x168] sm:$0xf]
    %v461 = vld [vmem:[%s1 + $0x16c] sm:$0xf]
    %v462 = vld [vmem:[%s1 + $0x170] sm:$0xf]
    %v463 = vld [vmem:[%s1 + $0x174] sm:$0xf]
    %v464 = vld [vmem:[%s1 + $0x178] sm:$0xf]
    %v465 = vld [vmem:[%s1 + $0x17c] sm:$0xf]
    %v466 = vld [vmem:[%s1 + $0x180] sm:$0xf]
    %v467 = vld [vmem:[%s1 + $0x184] sm:$0xf]
    %v468 = vld [vmem:[%s1 + $0x188] sm:$0xf]
    %v469 = vld [vmem:[%s1 + $0x18c] sm:$0xf]
    %v470 = vld [vmem:[%s1 + $0x190] sm:$0xf]
    %v471 = vld [vmem:[%s1 + $0x194] sm:$0xf]
    %v472 = vld [vmem:[%s1 + $0x198] sm:$0xf]
    %v473 = vld [vmem:[%s1 + $0x19c] sm:$0xf]
    %v474 = vld [vmem:[%s1 + $0x1a0] sm:$0xf]
    %v475 = vld [vmem:[%s1 + $0x1a4] sm:$0xf]
    %v476 = vld [vmem:[%s1 + $0x1a8] sm:$0xf]
    %v477 = vld [vmem:[%s1 + $0x1ac] sm:$0xf]
    %v478 = vld [vmem:[%s1 + $0x1b0] sm:$0xf]
    %v479 = vld [vmem:[%s1 + $0x1b4] sm:$0xf]
    %v480 = vld [vmem:[%s1 + $0x1b8] sm:$0xf]
    %v481 = vld [vmem:[%s1 + $0x1bc] sm:$0xf]
    %v482 = vld [vmem:[%s1 + $0x1c0] sm:$0xf]
    %v483 = vld [vmem:[%s1 + $0x1c4] sm:$0xf]
    %v484 = vld [vmem:[%s1 + $0x1c8] sm:$0xf]
    %v485 = vld [vmem:[%s1 + $0x1cc] sm:$0xf]
    %v486 = vld [vmem:[%s1 + $0x1d0] sm:$0xf]
    %v487 = vld [vmem:[%s1 + $0x1d4] sm:$0xf]
    %v488 = vld [vmem:[%s1 + $0x1d8] sm:$0xf]
    %v489 = vld [vmem:[%s1 + $0x1dc] sm:$0xf]
    %v490 = vld [vmem:[%s1 + $0x1e0] sm:$0xf]
    %v491 = vld [vmem:[%s1 + $0x1e4] sm:$0xf]
    %v492 = vld [vmem:[%s1 + $0x1e8] sm:$0xf]
    %v493 = vld [vmem:[%s1 + $0x1ec] sm:$0xf]
    %v494 = vld [vmem:[%s1 + $0x1f0] sm:$0xf]
    %v495 = vld [vmem:[%s1 + $0x1f4] sm:$0xf]
    %v496 = vld [vmem:[%s1 + $0x1f8] sm:$0xf]
    %v497 = vld [vmem:[%s1 + $0x1fc] sm:$0xf]
    %v498 = vld [vmem:[%s1 + $0x200] sm:$0xf]
    %v499 = vld [vmem:[%s1 + $0x204] sm:$0xf]
    %v500 = vld [vmem:[%s1 + $0x208] sm:$0xf]
    %v501 = vld [vmem:[%s1 + $0x20c] sm:$0xf]
    %v502 = vld [vmem:[%s1 + $0x210] sm:$0xf]
    %v503 = vld [vmem:[%s1 + $0x214] sm:$0xf]
    %v504 = vld [vmem:[%s1 + $0x218] sm:$0xf]
    %v505 = vld [vmem:[%s1 + $0x21c] sm:$0xf]
    %v506 = vld [vmem:[%s1 + $0x220] sm:$0xf]
    %v507 = vld [vmem:[%s1 + $0x224] sm:$0xf]
    %v508 = vld [vmem:[%s1 + $0x228] sm:$0xf]
    %v509 = vld [vmem:[%s1 + $0x22c] sm:$0xf]
    %v510 = vld [vmem:[%s1 + $0x230] sm:$0xf]
    %v511 = vld [vmem:[%s1 + $0x234] sm:$0xf]
    %v512 = vld [vmem:[%s1 + $0x238] sm:$0xf]
    %v513 = vld [vmem:[%s1 + $0x23c] sm:$0xf]
    %v514 = vld [vmem:[%s1 + $0x240] sm:$0xf]
    %v515 = vld [vmem:[%s1 + $0x244] sm:$0xf]
    %v516 = vld [vmem:[%s1 + $0x248] sm:$0xf]
    %v517 = vld [vmem:[%s1 + $0x24c] sm:$0xf]
    %v518 = vld [vmem:[%s1 + $0x250] sm:$0xf]
    %v519 = vld [vmem:[%s1 + $0x254] sm:$0xf]
    %v520 = vld [vmem:[%s1 + $0x258] sm:$0xf]
    %v521 = vld [vmem:[%s1 + $0x25c] sm:$0xf]
    %v522 = vld [vmem:[%s1 + $0x260] sm:$0xf]
    %v523 = vld [vmem:[%s1 + $0x264] sm:$0xf]
    %v524 = vld [vmem:[%s1 + $0x268] sm:$0xf]
    %v525 = vld [vmem:[%s1 + $0x26c] sm:$0xf]
    %v526 = vld [vmem:[%s1 + $0x270] sm:$0xf]
    %v527 = vld [vmem:[%s1 + $0x274] sm:$0xf]
    %v528 = vld [vmem:[%s1 + $0x278] sm:$0xf]
    %v529 = vld [vmem:[%s1 + $0x27c] sm:$0xf]
    %v530 = vld [vmem:[%s1 + $0x280] sm:$0xf]
    %v531 = vld [vmem:[%s1 + $0x284] sm:$0xf]
    %v532 = vld [vmem:[%s1 + $0x288] sm:$0xf]
    %v533 = vld [vmem:[%s1 + $0x28c] sm:$0xf]
    %v534 = vld [vmem:[%s1 + $0x290] sm:$0xf]
    %v535 = vld [vmem:[%s1 + $0x294] sm:$0xf]
    %v536 = vld [vmem:[%s1 + $0x298] sm:$0xf]
    %v537 = vld [vmem:[%s1 + $0x29c] sm:$0xf]
    %v538 = vld [vmem:[%s1 + $0x2a0] sm:$0xf]
    %v539 = vld [vmem:[%s1 + $0x2a4] sm:$0xf]
    %v540 = vld [vmem:[%s1 + $0x2a8] sm:$0xf]
    %v541 = vld [vmem:[%s1 + $0x2ac] sm:$0xf]
    %v542 = vld [vmem:[%s1 + $0x2b0] sm:$0xf]
    %v543 = vld [vmem:[%s1 + $0x2b4] sm:$0xf]
    %v544 = vld [vmem:[%s1 + $0x2b8] sm:$0xf]
    %v545 = vld [vmem:[%s1 + $0x2bc] sm:$0xf]
    %v546 = vld [vmem:[%s1 + $0x2c0] sm:$0xf]
    %v547 = vld [vmem:[%s1 + $0x2c4] sm:$0xf]
    %v548 = vld [vmem:[%s1 + $0x2c8] sm:$0xf]
    %v549 = vld [vmem:[%s1 + $0x2cc] sm:$0xf]
    %v550 = vld [vmem:[%s1 + $0x2d0] sm:$0xf]
    %v551 = vld [vmem:[%s1 + $0x2d4] sm:$0xf]
    %v552 = vld [vmem:[%s1 + $0x2d8] sm:$0xf]
    %v553 = vld [vmem:[%s1 + $0x2dc] sm:$0xf]
    %v554 = vld [vmem:[%s1 + $0x2e0] sm:$0xf]
    %v555 = vld [vmem:[%s1 + $0x2e4] sm:$0xf]
    %v556 = vld [vmem:[%s1 + $0x2e8] sm:$0xf]
    %v557 = vld [vmem:[%s1 + $0x2ec] sm:$0xf]
    %v558 = vld [vmem:[%s1 + $0x2f0] sm:$0xf]
    %v559 = vld [vmem:[%s1 + $0x2f4] sm:$0xf]
    %v560 = vld [vmem:[%s1 + $0x2f8] sm:$0xf]
    %v561 = vld [vmem:[%s1 + $0x2fc] sm:$0xf]
    %v562 = vld [vmem:[%s1 + $0x300] sm:$0xf]
    %v563 = vld [vmem:[%s1 + $0x304] sm:$0xf]
    %v564 = vld [vmem:[%s1 + $0x308] sm:$0xf]
    %v565 = vld [vmem:[%s1 + $0x30c] sm:$0xf]
    %v566 = vld [vmem:[%s1 + $0x310] sm:$0xf]
    %v567 = vld [vmem:[%s1 + $0x314] sm:$0xf]
    %v568 = vld [vmem:[%s1 + $0x318] sm:$0xf]
    %v569 = vld [vmem:[%s1 + $0x31c] sm:$0xf]
    %v570 = vld [vmem:[%s1 + $0x320] sm:$0xf]
    %v571 = vld [vmem:[%s1 + $0x324] sm:$0xf]
    %v572 = vld [vmem:[%s1 + $0x328] sm:$0xf]
    %v573 = vld [vmem:[%s1 + $0x32c] sm:$0xf]
    %v574 = vld [vmem:[%s1 + $0x330] sm:$0xf]
    %v575 = vld [vmem:[%s1 + $0x334] sm:$0xf]
    %v576 = vld [vmem:[%s1 + $0x338] sm:$0xf]
    %v577 = vld [vmem:[%s1 + $0x33c] sm:$0xf]
    %v578 = vld [vmem:[%s1 + $0x340] sm:$0xf]
    %v579 = vld [vmem:[%s1 + $0x344] sm:$0xf]
    %v580 = vld [vmem:[%s1 + $0x348] sm:$0xf]
    %v581 = vld [vmem:[%s1 + $0x34c] sm:$0xf]
    %v582 = vld [vmem:[%s1 + $0x350] sm:$0xf]
    %v583 = vld [vmem:[%s1 + $0x354] sm:$0xf]
    %v584 = vld [vmem:[%s1 + $0x358] sm:$0xf]
    %v585 = vld [vmem:[%s1 + $0x35c] sm:$0xf]
    %v586 = vld [vmem:[%s1 + $0x360] sm:$0xf]
    %v587 = vld [vmem:[%s1 + $0x364] sm:$0xf]
    %v588 = vld [vmem:[%s1 + $0x368] sm:$0xf]
    %v589 = vld [vmem:[%s1 + $0x36c] sm:$0xf]
    %v590 = vld [vmem:[%s1 + $0x370] sm:$0xf]
    %v591 = vld [vmem:[%s1 + $0x374] sm:$0xf]
    %v592 = vld [vmem:[%s1 + $0x378] sm:$0xf]
    %v593 = vld [vmem:[%s1 + $0x37c] sm:$0xf]
    %v594 = vld [vmem:[%s1 + $0x380] sm:$0xf]
    %v595 = vld [vmem:[%s1 + $0x384] sm:$0xf]
    %v596 = vld [vmem:[%s1 + $0x388] sm:$0xf]
    %v597 = vld [vmem:[%s1 + $0x38c] sm:$0xf]
    %v598 = vld [vmem:[%s1 + $0x390] sm:$0xf]
    %v599 = vld [vmem:[%s1 + $0x394] sm:$0xf]
    %v600 = vld [vmem:[%s1 + $0x398] sm:$0xf]
    %v601 = vld [vmem:[%s1 + $0x39c] sm:$0xf]
    %v602 = vld [vmem:[%s1 + $0x3a0] sm:$0xf]
    %v603 = vld [vmem:[%s1 + $0x3a4] sm:$0xf]
    %v604 = vld [vmem:[%s1 + $0x3a8] sm:$0xf]
    %v605 = vld [vmem:[%s1 + $0x3ac] sm:$0xf]
    %v606 = vld [vmem:[%s1 + $0x3b0] sm:$0xf]
    %v607 = vld [vmem:[%s1 + $0x3b4] sm:$0xf]
    %v608 = vld [vmem:[%s1 + $0x3b8] sm:$0xf]
    %v609 = vld [vmem:[%s1 + $0x3bc] sm:$0xf]
    %v610 = vld [vmem:[%s1 + $0x3c0] sm:$0xf]
    %v611 = vld [vmem:[%s1 + $0x3c4] sm:$0xf]
    %v612 = vld [vmem:[%s1 + $0x3c8] sm:$0xf]
    %v613 = vld [vmem:[%s1 + $0x3cc] sm:$0xf]
    %v614 = vld [vmem:[%s1 + $0x3d0] sm:$0xf]
    %v615 = vld [vmem:[%s1 + $0x3d4] sm:$0xf]
    %v616 = vld [vmem:[%s1 + $0x3d8] sm:$0xf]
    %v617 = vld [vmem:[%s1 + $0x3dc] sm:$0xf]
    %v618 = vld [vmem:[%s1 + $0x3e0] sm:$0xf]
    %v619 = vld [vmem:[%s1 + $0x3e4] sm:$0xf]
    %v620 = vld [vmem:[%s1 + $0x3e8] sm:$0xf]
    %v621 = vld [vmem:[%s1 + $0x3ec] sm:$0xf]
    %v622 = vld [vmem:[%s1 + $0x3f0] sm:$0xf]
    %v623 = vld [vmem:[%s1 + $0x3f4] sm:$0xf]
    %v624 = vld [vmem:[%s1 + $0x3f8] sm:$0xf]
    %v625 = vld [vmem:[%s1 + $0x3fc] sm:$0xf]
    %v626 = vld [vmem:[%s1 + $0x400] sm:$0xf]
    %v627 = vld [vmem:[%s1 + $0x404] sm:$0xf]
    %v628 = vld [vmem:[%s1 + $0x408] sm:$0xf]
    %v629 = vld [vmem:[%s1 + $0x40c] sm:$0xf]
    %v630 = vld [vmem:[%s1 + $0x410] sm:$0xf]
    %v631 = vld [vmem:[%s1 + $0x414] sm:$0xf]
    %v632 = vld [vmem:[%s1 + $0x418] sm:$0xf]
    %v633 = vld [vmem:[%s1 + $0x41c] sm:$0xf]
    %v634 = vld [vmem:[%s1 + $0x420] sm:$0xf]
    %v635 = vld [vmem:[%s1 + $0x424] sm:$0xf]
    %v636 = vld [vmem:[%s1 + $0x428] sm:$0xf]
    %v637 = vld [vmem:[%s1 + $0x42c] sm:$0xf]
    %v638 = vld [vmem:[%s1 + $0x430] sm:$0xf]
    %v639 = vld [vmem:[%s1 + $0x434] sm:$0xf]
    %v640 = vld [vmem:[%s1 + $0x438] sm:$0xf]
    %v641 = vld [vmem:[%s1 + $0x43c] sm:$0xf]
    %v642 = vld [vmem:[%s1 + $0x440] sm:$0xf]
    %v643 = vld [vmem:[%s1 + $0x444] sm:$0xf]
    %v644 = vld [vmem:[%s1 + $0x448] sm:$0xf]
    %v645 = vld [vmem:[%s1 + $0x44c] sm:$0xf]
    %v646 = vld [vmem:[%s1 + $0x450] sm:$0xf]
    %v647 = vld [vmem:[%s1 + $0x454] sm:$0xf]
    %v648 = vld [vmem:[%s1 + $0x458] sm:$0xf]
    %v649 = vld [vmem:[%s1 + $0x45c] sm:$0xf]
    %v650 = vld [vmem:[%s1 + $0x460] sm:$0xf]
    %v651 = vld [vmem:[%s1 + $0x464] sm:$0xf]
    %v652 = vld [vmem:[%s1 + $0x468] sm:$0xf]
    %v653 = vld [vmem:[%s1 + $0x46c] sm:$0xf]
    %v654 = vld [vmem:[%s1 + $0x470] sm:$0xf]
    %v655 = vld [vmem:[%s1 + $0x474] sm:$0xf]
    %v656 = vld [vmem:[%s1 + $0x478] sm:$0xf]
    %v657 = vld [vmem:[%s1 + $0x47c] sm:$0xf]
    %v658 = vld [vmem:[%s1 + $0x480] sm:$0xf]
    %v659 = vld [vmem:[%s1 + $0x484] sm:$0xf]
    %v660 = vld [vmem:[%s1 + $0x488] sm:$0xf]
    %v661 = vld [vmem:[%s1 + $0x48c] sm:$0xf]
    %v662 = vld [vmem:[%s1 + $0x490] sm:$0xf]
    %v663 = vld [vmem:[%s1 + $0x494] sm:$0xf]
    %v664 = vld [vmem:[%s1 + $0x498] sm:$0xf]
    %v665 = vld [vmem:[%s1 + $0x49c] sm:$0xf]
    %v666 = vld [vmem:[%s1 + $0x4a0] sm:$0xf]
    %v667 = vld [vmem:[%s1 + $0x4a4] sm:$0xf]
    %v668 = vld [vmem:[%s1 + $0x4a8] sm:$0xf]
    %v669 = vld [vmem:[%s1 + $0x4ac] sm:$0xf]
    %v670 = vld [vmem:[%s1 + $0x4b0] sm:$0xf]
    %v671 = vld [vmem:[%s1 + $0x4b4] sm:$0xf]
    %v672 = vld [vmem:[%s1 + $0x4b8] sm:$0xf]
    %v673 = vld [vmem:[%s1 + $0x4bc] sm:$0xf]
    %v674 = vld [vmem:[%s1 + $0x4c0] sm:$0xf]
    %v675 = vld [vmem:[%s1 + $0x4c4] sm:$0xf]
    %v676 = vld [vmem:[%s1 + $0x4c8] sm:$0xf]
    %v677 = vld [vmem:[%s1 + $0x4cc] sm:$0xf]
    %v678 = vld [vmem:[%s1 + $0x4d0] sm:$0xf]
    %v679 = vld [vmem:[%s1 + $0x4d4] sm:$0xf]
    %v680 = vld [vmem:[%s1 + $0x4d8] sm:$0xf]
    %v681 = vld [vmem:[%s1 + $0x4dc] sm:$0xf]
    %v682 = vld [vmem:[%s1 + $0x4e0] sm:$0xf]
    %v683 = vld [vmem:[%s1 + $0x4e4] sm:$0xf]
    %v684 = vld [vmem:[%s1 + $0x4e8] sm:$0xf]
    %v685 = vld [vmem:[%s1 + $0x4ec] sm:$0xf]
    %v686 = vld [vmem:[%s1 + $0x4f0] sm:$0xf]
    %v687 = vld [vmem:[%s1 + $0x4f4] sm:$0xf]
    %v688 = vld [vmem:[%s1 + $0x4f8] sm:$0xf]
    %v689 = vld [vmem:[%s1 + $0x4fc] sm:$0xf]
    %v690 = vld [vmem:[%s1 + $0x500] sm:$0xf]
    %v691 = vld [vmem:[%s1 + $0x504] sm:$0xf]
    %v692 = vld [vmem:[%s1 + $0x508] sm:$0xf]
    %v693 = vld [vmem:[%s1 + $0x50c] sm:$0xf]
    %v694 = vld [vmem:[%s1 + $0x510] sm:$0xf]
    %v695 = vld [vmem:[%s1 + $0x514] sm:$0xf]
    %v696 = vld [vmem:[%s1 + $0x518] sm:$0xf]
    %v697 = vld [vmem:[%s1 + $0x51c] sm:$0xf]
    %v698 = vld [vmem:[%s1 + $0x520] sm:$0xf]
    %v699 = vld [vmem:[%s1 + $0x524] sm:$0xf]
    %v700 = vld [vmem:[%s1 + $0x528] sm:$0xf]
    %v701 = vld [vmem:[%s1 + $0x52c] sm:$0xf]
    %v702 = vld [vmem:[%s1 + $0x530] sm:$0xf]
    %v703 = vld [vmem:[%s1 + $0x534] sm:$0xf]
    %v704 = vld [vmem:[%s1 + $0x538] sm:$0xf]
    %v705 = vld [vmem:[%s1 + $0x53c] sm:$0xf]
    %v706 = vld [vmem:[%s1 + $0x540] sm:$0xf]
    %v707 = vld [vmem:[%s1 + $0x544] sm:$0xf]
    %v708 = vld [vmem:[%s1 + $0x548] sm:$0xf]
    %v709 = vld [vmem:[%s1 + $0x54c] sm:$0xf]
    %v710 = vld [vmem:[%s1 + $0x550] sm:$0xf]
    %v711 = vld [vmem:[%s1 + $0x554] sm:$0xf]
    %v712 = vld [vmem:[%s1 + $0x558] sm:$0xf]
    %v713 = vld [vmem:[%s1 + $0x55c] sm:$0xf]
    %v714 = vld [vmem:[%s1 + $0x560] sm:$0xf]
    %v715 = vld [vmem:[%s1 + $0x564] sm:$0xf]
    %v716 = vld [vmem:[%s1 + $0x568] sm:$0xf]
    %v717 = vld [vmem:[%s1 + $0x56c] sm:$0xf]
    %v718 = vld [vmem:[%s1 + $0x570] sm:$0xf]
    %v719 = vld [vmem:[%s1 + $0x574] sm:$0xf]
    %v720 = vld [vmem:[%s1 + $0x578] sm:$0xf]
    %v721 = vld [vmem:[%s1 + $0x57c] sm:$0xf]
    %v722 = vld [vmem:[%s1 + $0x580] sm:$0xf]
    %v723 = vld [vmem:[%s1 + $0x584] sm:$0xf]
    %v724 = vld [vmem:[%s1 + $0x588] sm:$0xf]
    %v725 = vld [vmem:[%s1 + $0x58c] sm:$0xf]
    %v726 = vld [vmem:[%s1 + $0x590] sm:$0xf]
    %v727 = vld [vmem:[%s1 + $0x594] sm:$0xf]
    %v728 = vld [vmem:[%s1 + $0x598] sm:$0xf]
    %v729 = vld [vmem:[%s1 + $0x59c] sm:$0xf]
    %v730 = vld [vmem:[%s1 + $0x5a0] sm:$0xf]
    %v731 = vld [vmem:[%s1 + $0x5a4] sm:$0xf]
    %v732 = vld [vmem:[%s1 + $0x5a8] sm:$0xf]
    %v733 = vld [vmem:[%s1 + $0x5ac] sm:$0xf]
    %v734 = vld [vmem:[%s1 + $0x5b0] sm:$0xf]
    %v735 = vld [vmem:[%s1 + $0x5b4] sm:$0xf]
    %v736 = vld [vmem:[%s1 + $0x5b8] sm:$0xf]
    %v737 = vld [vmem:[%s1 + $0x5bc] sm:$0xf]
    %v738 = vld [vmem:[%s1 + $0x5c0] sm:$0xf]
    %v739 = vld [vmem:[%s1 + $0x5c4] sm:$0xf]
    %v740 = vld [vmem:[%s1 + $0x5c8] sm:$0xf]
    %v741 = vld [vmem:[%s1 + $0x5cc] sm:$0xf]
    %v742 = vld [vmem:[%s1 + $0x5d0] sm:$0xf]
    %v743 = vld [vmem:[%s1 + $0x5d4] sm:$0xf]
    %v744 = vld [vmem:[%s1 + $0x5d8] sm:$0xf]
    %v745 = vld [vmem:[%s1 + $0x5dc] sm:$0xf]
    %v746 = vld [vmem:[%s1 + $0x5e0] sm:$0xf]
    %v747 = vld [vmem:[%s1 + $0x5e4] sm:$0xf]
    %v748 = vld [vmem:[%s1 + $0x5e8] sm:$0xf]
    %v749 = vld [vmem:[%s1 + $0x5ec] sm:$0xf]
    %v750 = vld [vmem:[%s1 + $0x5f0] sm:$0xf]
    %v751 = vld [vmem:[%s1 + $0x5f4] sm:$0xf]
    %v752 = vld [vmem:[%s1 + $0x5f8] sm:$0xf]
    %v753 = vld [vmem:[%s1 + $0x5fc] sm:$0xf]
    %v754 = vld [vmem:[%s1 + $0x600] sm:$0xf]
    %v755 = vld [vmem:[%s1 + $0x604] sm:$0xf]
    %v756 = vld [vmem:[%s1 + $0x608] sm:$0xf]
    %v757 = vld [vmem:[%s1 + $0x60c] sm:$0xf]
    %v758 = vld [vmem:[%s1 + $0x610] sm:$0xf]
    %v759 = vld [vmem:[%s1 + $0x614] sm:$0xf]
    %v760 = vld [vmem:[%s1 + $0x618] sm:$0xf]
    %v761 = vld [vmem:[%s1 + $0x61c] sm:$0xf]
    %v762 = vld [vmem:[%s1 + $0x620] sm:$0xf]
    %v763 = vld [vmem:[%s1 + $0x624] sm:$0xf]
    %v764 = vld [vmem:[%s1 + $0x628] sm:$0xf]
    %v765 = vld [vmem:[%s1 + $0x62c] sm:$0xf]
    %v766 = vld [vmem:[%s1 + $0x630] sm:$0xf]
    %v767 = vld [vmem:[%s1 + $0x634] sm:$0xf]
    %v768 = vld [vmem:[%s1 + $0x638] sm:$0xf]
    %v769 = vld [vmem:[%s1 + $0x63c] sm:$0xf]
    %v770 = vld [vmem:[%s1 + $0x640] sm:$0xf]
    %v771 = vld [vmem:[%s1 + $0x644] sm:$0xf]
    %v772 = vld [vmem:[%s1 + $0x648] sm:$0xf]
    %v773 = vld [vmem:[%s1 + $0x64c] sm:$0xf]
    %v774 = vld [vmem:[%s1 + $0x650] sm:$0xf]
    %v775 = vld [vmem:[%s2] sm:$0x1]
    %v777 = vlaneseq
    %v778 = vshrl.u32 %v777, 7
    %v779 = vsub.s32 0, %v778
    %v780 = vrot.slane %v775, %v779
    %v1187 = vunpack.c.l.b16 %v370
    %v1188 = vunpack.c.l.b16 %v371
    %v1189 = vunpack.c.l.b16 %v372
    %v1190 = vunpack.c.l.b16 %v373
    %v1191 = vunpack.c.l.b16 %v374
    %v1192 = vunpack.c.l.b16 %v375
    %v1193 = vunpack.c.l.b16 %v376
    %v1194 = vunpack.c.l.b16 %v377
    %v1195 = vunpack.c.l.b16 %v378
    %v1196 = vunpack.c.l.b16 %v379
    %v1197 = vunpack.c.l.b16 %v380
    %v1198 = vunpack.c.l.b16 %v381
    %v1199 = vunpack.c.l.b16 %v382
    %v1200 = vunpack.c.l.b16 %v383
    %v1201 = vunpack.c.l.b16 %v384
    %v1202 = vunpack.c.l.b16 %v385
    %v1203 = vunpack.c.l.b16 %v386
    %v1204 = vunpack.c.l.b16 %v387
    %v1205 = vunpack.c.l.b16 %v388
    %v1206 = vunpack.c.l.b16 %v389
    %v1207 = vunpack.c.l.b16 %v390
    %v1208 = vunpack.c.l.b16 %v391
    %v1209 = vunpack.c.l.b16 %v392
    %v1210 = vunpack.c.l.b16 %v393
    %v1211 = vunpack.c.l.b16 %v394
    %v1212 = vunpack.c.l.b16 %v395
    %v1213 = vunpack.c.l.b16 %v396
    %v1214 = vunpack.c.l.b16 %v397
    %v1215 = vunpack.c.l.b16 %v398
    %v1216 = vunpack.c.l.b16 %v399
    %v1217 = vunpack.c.l.b16 %v400
    %v1218 = vunpack.c.l.b16 %v401
    %v1219 = vunpack.c.l.b16 %v402
    %v1220 = vunpack.c.l.b16 %v403
    %v1221 = vunpack.c.l.b16 %v404
    %v1222 = vunpack.c.l.b16 %v405
    %v1223 = vunpack.c.l.b16 %v406
    %v1224 = vunpack.c.l.b16 %v407
    %v1225 = vunpack.c.l.b16 %v408
    %v1226 = vunpack.c.l.b16 %v409
    %v1227 = vunpack.c.l.b16 %v410
    %v1228 = vunpack.c.l.b16 %v411
    %v1229 = vunpack.c.l.b16 %v412
    %v1230 = vunpack.c.l.b16 %v413
    %v1231 = vunpack.c.l.b16 %v414
    %v1232 = vunpack.c.l.b16 %v415
    %v1233 = vunpack.c.l.b16 %v416
    %v1234 = vunpack.c.l.b16 %v417
    %v1235 = vunpack.c.l.b16 %v418
    %v1236 = vunpack.c.l.b16 %v419
    %v1237 = vunpack.c.l.b16 %v420
    %v1238 = vunpack.c.l.b16 %v421
    %v1239 = vunpack.c.l.b16 %v422
    %v1240 = vunpack.c.l.b16 %v423
    %v1241 = vunpack.c.l.b16 %v424
    %v1242 = vunpack.c.l.b16 %v425
    %v1243 = vunpack.c.l.b16 %v426
    %v1244 = vunpack.c.l.b16 %v427
    %v1245 = vunpack.c.l.b16 %v428
    %v1246 = vunpack.c.l.b16 %v429
    %v1247 = vunpack.c.l.b16 %v430
    %v1248 = vunpack.c.l.b16 %v431
    %v1249 = vunpack.c.l.b16 %v432
    %v1250 = vunpack.c.l.b16 %v433
    %v1251 = vunpack.c.l.b16 %v434
    %v1252 = vunpack.c.l.b16 %v435
    %v1253 = vunpack.c.l.b16 %v436
    %v1254 = vunpack.c.l.b16 %v437
    %v1255 = vunpack.c.l.b16 %v438
    %v1256 = vunpack.c.l.b16 %v439
    %v1257 = vunpack.c.l.b16 %v440
    %v1258 = vunpack.c.l.b16 %v441
    %v1259 = vunpack.c.l.b16 %v442
    %v1260 = vunpack.c.l.b16 %v443
    %v1261 = vunpack.c.l.b16 %v444
    %v1262 = vunpack.c.l.b16 %v445
    %v1263 = vunpack.c.l.b16 %v446
    %v1264 = vunpack.c.l.b16 %v447
    %v1265 = vunpack.c.l.b16 %v448
    %v1266 = vunpack.c.l.b16 %v449
    %v1267 = vunpack.c.l.b16 %v450
    %v1268 = vunpack.c.l.b16 %v451
    %v1269 = vunpack.c.l.b16 %v452
    %v1270 = vunpack.c.l.b16 %v453
    %v1271 = vunpack.c.l.b16 %v454
    %v1272 = vunpack.c.l.b16 %v455
    %v1273 = vunpack.c.l.b16 %v456
    %v1274 = vunpack.c.l.b16 %v457
    %v1275 = vunpack.c.l.b16 %v458
    %v1276 = vunpack.c.l.b16 %v459
    %v1277 = vunpack.c.l.b16 %v460
    %v1278 = vunpack.c.l.b16 %v461
    %v1279 = vunpack.c.l.b16 %v462
    %v1280 = vunpack.c.l.b16 %v463
    %v1281 = vunpack.c.l.b16 %v464
    %v1282 = vunpack.c.l.b16 %v465
    %v1283 = vunpack.c.l.b16 %v466
    %v1284 = vunpack.c.l.b16 %v467
    %v1285 = vunpack.c.l.b16 %v468
    %v1286 = vunpack.c.l.b16 %v469
    %v1287 = vunpack.c.l.b16 %v470
    %v1288 = vunpack.c.l.b16 %v471
    %v1289 = vunpack.c.l.b16 %v472
    %v1290 = vunpack.c.l.b16 %v473
    %v1291 = vunpack.c.l.b16 %v474
    %v1292 = vunpack.c.l.b16 %v475
    %v1293 = vunpack.c.l.b16 %v476
    %v1294 = vunpack.c.l.b16 %v477
    %v1295 = vunpack.c.l.b16 %v478
    %v1296 = vunpack.c.l.b16 %v479
    %v1297 = vunpack.c.l.b16 %v480
    %v1298 = vunpack.c.l.b16 %v481
    %v1299 = vunpack.c.l.b16 %v482
    %v1300 = vunpack.c.l.b16 %v483
    %v1301 = vunpack.c.l.b16 %v484
    %v1302 = vunpack.c.l.b16 %v485
    %v1303 = vunpack.c.l.b16 %v486
    %v1304 = vunpack.c.l.b16 %v487
    %v1305 = vunpack.c.l.b16 %v488
    %v1306 = vunpack.c.l.b16 %v489
    %v1307 = vunpack.c.l.b16 %v490
    %v1308 = vunpack.c.l.b16 %v491
    %v1309 = vunpack.c.l.b16 %v492
    %v1310 = vunpack.c.l.b16 %v493
    %v1311 = vunpack.c.l.b16 %v494
    %v1312 = vunpack.c.l.b16 %v495
    %v1313 = vunpack.c.l.b16 %v496
    %v1314 = vunpack.c.l.b16 %v497
    %v1315 = vunpack.c.l.b16 %v498
    %v1316 = vunpack.c.l.b16 %v499
    %v1317 = vunpack.c.l.b16 %v500
    %v1318 = vunpack.c.l.b16 %v501
    %v1319 = vunpack.c.l.b16 %v502
    %v1320 = vunpack.c.l.b16 %v503
    %v1321 = vunpack.c.l.b16 %v504
    %v1322 = vunpack.c.l.b16 %v505
    %v1323 = vunpack.c.l.b16 %v506
    %v1324 = vunpack.c.l.b16 %v507
    %v1325 = vunpack.c.l.b16 %v508
    %v1326 = vunpack.c.l.b16 %v509
    %v1327 = vunpack.c.l.b16 %v510
    %v1328 = vunpack.c.l.b16 %v511
    %v1329 = vunpack.c.l.b16 %v512
    %v1330 = vunpack.c.l.b16 %v513
    %v1331 = vunpack.c.l.b16 %v514
    %v1332 = vunpack.c.l.b16 %v515
    %v1333 = vunpack.c.l.b16 %v516
    %v1334 = vunpack.c.l.b16 %v517
    %v1335 = vunpack.c.l.b16 %v518
    %v1336 = vunpack.c.l.b16 %v519
    %v1337 = vunpack.c.l.b16 %v520
    %v1338 = vunpack.c.l.b16 %v521
    %v1339 = vunpack.c.l.b16 %v522
    %v1340 = vunpack.c.l.b16 %v523
    %v1341 = vunpack.c.l.b16 %v524
    %v1342 = vunpack.c.l.b16 %v525
    %v1343 = vunpack.c.l.b16 %v526
    %v1344 = vunpack.c.l.b16 %v527
    %v1345 = vunpack.c.l.b16 %v528
    %v1346 = vunpack.c.l.b16 %v529
    %v1347 = vunpack.c.l.b16 %v530
    %v1348 = vunpack.c.l.b16 %v531
    %v1349 = vunpack.c.l.b16 %v532
    %v1350 = vunpack.c.l.b16 %v533
    %v1351 = vunpack.c.l.b16 %v534
    %v1352 = vunpack.c.l.b16 %v535
    %v1353 = vunpack.c.l.b16 %v536
    %v1354 = vunpack.c.l.b16 %v537
    %v1355 = vunpack.c.l.b16 %v538
    %v1356 = vunpack.c.l.b16 %v539
    %v1357 = vunpack.c.l.b16 %v540
    %v1358 = vunpack.c.l.b16 %v541
    %v1359 = vunpack.c.l.b16 %v542
    %v1360 = vunpack.c.l.b16 %v543
    %v1361 = vunpack.c.l.b16 %v544
    %v1362 = vunpack.c.l.b16 %v545
    %v1363 = vunpack.c.l.b16 %v546
    %v1364 = vunpack.c.l.b16 %v547
    %v1365 = vunpack.c.l.b16 %v548
    %v1366 = vunpack.c.l.b16 %v549
    %v1367 = vunpack.c.l.b16 %v550
    %v1368 = vunpack.c.l.b16 %v551
    %v1369 = vunpack.c.l.b16 %v552
    %v1370 = vunpack.c.l.b16 %v553
    %v1371 = vunpack.c.l.b16 %v554
    %v1372 = vunpack.c.l.b16 %v555
    %v1373 = vunpack.c.l.b16 %v556
    %v1374 = vunpack.c.l.b16 %v557
    %v1375 = vunpack.c.l.b16 %v558
    %v1376 = vunpack.c.l.b16 %v559
    %v1377 = vunpack.c.l.b16 %v560
    %v1378 = vunpack.c.l.b16 %v561
    %v1379 = vunpack.c.l.b16 %v562
    %v1380 = vunpack.c.l.b16 %v563
    %v1381 = vunpack.c.l.b16 %v564
    %v1382 = vunpack.c.l.b16 %v565
    %v1383 = vunpack.c.l.b16 %v566
    %v1384 = vunpack.c.l.b16 %v567
    %v1385 = vunpack.c.l.b16 %v568
    %v1386 = vunpack.c.l.b16 %v569
    %v1387 = vunpack.c.l.b16 %v570
    %v1388 = vunpack.c.l.b16 %v571
    %v1389 = vunpack.c.l.b16 %v572
    %v1390 = vunpack.c.l.b16 %v573
    %v1391 = vunpack.c.l.b16 %v574
    %v1392 = vunpack.c.l.b16 %v575
    %v1393 = vunpack.c.l.b16 %v576
    %v1394 = vunpack.c.l.b16 %v577
    %v1395 = vunpack.c.l.b16 %v578
    %v1396 = vunpack.c.l.b16 %v579
    %v1397 = vunpack.c.l.b16 %v580
    %v1398 = vunpack.c.l.b16 %v581
    %v1399 = vunpack.c.l.b16 %v582
    %v1400 = vunpack.c.l.b16 %v583
    %v1401 = vunpack.c.l.b16 %v584
    %v1402 = vunpack.c.l.b16 %v585
    %v1403 = vunpack.c.l.b16 %v586
    %v1404 = vunpack.c.l.b16 %v587
    %v1405 = vunpack.c.l.b16 %v588
    %v1406 = vunpack.c.l.b16 %v589
    %v1407 = vunpack.c.l.b16 %v590
    %v1408 = vunpack.c.l.b16 %v591
    %v1409 = vunpack.c.l.b16 %v592
    %v1410 = vunpack.c.l.b16 %v593
    %v1411 = vunpack.c.l.b16 %v594
    %v1412 = vunpack.c.l.b16 %v595
    %v1413 = vunpack.c.l.b16 %v596
    %v1414 = vunpack.c.l.b16 %v597
    %v1415 = vunpack.c.l.b16 %v598
    %v1416 = vunpack.c.l.b16 %v599
    %v1417 = vunpack.c.l.b16 %v600
    %v1418 = vunpack.c.l.b16 %v601
    %v1419 = vunpack.c.l.b16 %v602
    %v1420 = vunpack.c.l.b16 %v603
    %v1421 = vunpack.c.l.b16 %v604
    %v1422 = vunpack.c.l.b16 %v605
    %v1423 = vunpack.c.l.b16 %v606
    %v1424 = vunpack.c.l.b16 %v607
    %v1425 = vunpack.c.l.b16 %v608
    %v1426 = vunpack.c.l.b16 %v609
    %v1427 = vunpack.c.l.b16 %v610
    %v1428 = vunpack.c.l.b16 %v611
    %v1429 = vunpack.c.l.b16 %v612
    %v1430 = vunpack.c.l.b16 %v613
    %v1431 = vunpack.c.l.b16 %v614
    %v1432 = vunpack.c.l.b16 %v615
    %v1433 = vunpack.c.l.b16 %v616
    %v1434 = vunpack.c.l.b16 %v617
    %v1435 = vunpack.c.l.b16 %v618
    %v1436 = vunpack.c.l.b16 %v619
    %v1437 = vunpack.c.l.b16 %v620
    %v1438 = vunpack.c.l.b16 %v621
    %v1439 = vunpack.c.l.b16 %v622
    %v1440 = vunpack.c.l.b16 %v623
    %v1441 = vunpack.c.l.b16 %v624
    %v1442 = vunpack.c.l.b16 %v625
    %v1443 = vunpack.c.l.b16 %v626
    %v1444 = vunpack.c.l.b16 %v627
    %v1445 = vunpack.c.l.b16 %v628
    %v1446 = vunpack.c.l.b16 %v629
    %v1447 = vunpack.c.l.b16 %v630
    %v1448 = vunpack.c.l.b16 %v631
    %v1449 = vunpack.c.l.b16 %v632
    %v1450 = vunpack.c.l.b16 %v633
    %v1451 = vunpack.c.l.b16 %v634
    %v1452 = vunpack.c.l.b16 %v635
    %v1453 = vunpack.c.l.b16 %v636
    %v1454 = vunpack.c.l.b16 %v637
    %v1455 = vunpack.c.l.b16 %v638
    %v1456 = vunpack.c.l.b16 %v639
    %v1457 = vunpack.c.l.b16 %v640
    %v1458 = vunpack.c.l.b16 %v641
    %v1459 = vunpack.c.l.b16 %v642
    %v1460 = vunpack.c.l.b16 %v643
    %v1461 = vunpack.c.l.b16 %v644
    %v1462 = vunpack.c.l.b16 %v645
    %v1463 = vunpack.c.l.b16 %v646
    %v1464 = vunpack.c.l.b16 %v647
    %v1465 = vunpack.c.l.b16 %v648
    %v1466 = vunpack.c.l.b16 %v649
    %v1467 = vunpack.c.l.b16 %v650
    %v1468 = vunpack.c.l.b16 %v651
    %v1469 = vunpack.c.l.b16 %v652
    %v1470 = vunpack.c.l.b16 %v653
    %v1471 = vunpack.c.l.b16 %v654
    %v1472 = vunpack.c.l.b16 %v655
    %v1473 = vunpack.c.l.b16 %v656
    %v1474 = vunpack.c.l.b16 %v657
    %v1475 = vunpack.c.l.b16 %v658
    %v1476 = vunpack.c.l.b16 %v659
    %v1477 = vunpack.c.l.b16 %v660
    %v1478 = vunpack.c.l.b16 %v661
    %v1479 = vunpack.c.l.b16 %v662
    %v1480 = vunpack.c.l.b16 %v663
    %v1481 = vunpack.c.l.b16 %v664
    %v1482 = vunpack.c.l.b16 %v665
    %v1483 = vunpack.c.l.b16 %v666
    %v1484 = vunpack.c.l.b16 %v667
    %v1485 = vunpack.c.l.b16 %v668
    %v1486 = vunpack.c.l.b16 %v669
    %v1487 = vunpack.c.l.b16 %v670
    %v1488 = vunpack.c.l.b16 %v671
    %v1489 = vunpack.c.l.b16 %v672
    %v1490 = vunpack.c.l.b16 %v673
    %v1491 = vunpack.c.l.b16 %v674
    %v1492 = vunpack.c.l.b16 %v675
    %v1493 = vunpack.c.l.b16 %v676
    %v1494 = vunpack.c.l.b16 %v677
    %v1495 = vunpack.c.l.b16 %v678
    %v1496 = vunpack.c.l.b16 %v679
    %v1497 = vunpack.c.l.b16 %v680
    %v1498 = vunpack.c.l.b16 %v681
    %v1499 = vunpack.c.l.b16 %v682
    %v1500 = vunpack.c.l.b16 %v683
    %v1501 = vunpack.c.l.b16 %v684
    %v1502 = vunpack.c.l.b16 %v685
    %v1503 = vunpack.c.l.b16 %v686
    %v1504 = vunpack.c.l.b16 %v687
    %v1505 = vunpack.c.l.b16 %v688
    %v1506 = vunpack.c.l.b16 %v689
    %v1507 = vunpack.c.l.b16 %v690
    %v1508 = vunpack.c.l.b16 %v691
    %v1509 = vunpack.c.l.b16 %v692
    %v1510 = vunpack.c.l.b16 %v693
    %v1511 = vunpack.c.l.b16 %v694
    %v1512 = vunpack.c.l.b16 %v695
    %v1513 = vunpack.c.l.b16 %v696
    %v1514 = vunpack.c.l.b16 %v697
    %v1515 = vunpack.c.l.b16 %v698
    %v1516 = vunpack.c.l.b16 %v699
    %v1517 = vunpack.c.l.b16 %v700
    %v1518 = vunpack.c.l.b16 %v701
    %v1519 = vunpack.c.l.b16 %v702
    %v1520 = vunpack.c.l.b16 %v703
    %v1521 = vunpack.c.l.b16 %v704
    %v1522 = vunpack.c.l.b16 %v705
    %v1523 = vunpack.c.l.b16 %v706
    %v1524 = vunpack.c.l.b16 %v707
    %v1525 = vunpack.c.l.b16 %v708
    %v1526 = vunpack.c.l.b16 %v709
    %v1527 = vunpack.c.l.b16 %v710
    %v1528 = vunpack.c.l.b16 %v711
    %v1529 = vunpack.c.l.b16 %v712
    %v1530 = vunpack.c.l.b16 %v713
    %v1531 = vunpack.c.l.b16 %v714
    %v1532 = vunpack.c.l.b16 %v715
    %v1533 = vunpack.c.l.b16 %v716
    %v1534 = vunpack.c.l.b16 %v717
    %v1535 = vunpack.c.l.b16 %v718
    %v1536 = vunpack.c.l.b16 %v719
    %v1537 = vunpack.c.l.b16 %v720
    %v1538 = vunpack.c.l.b16 %v721
    %v1539 = vunpack.c.l.b16 %v722
    %v1540 = vunpack.c.l.b16 %v723
    %v1541 = vunpack.c.l.b16 %v724
    %v1542 = vunpack.c.l.b16 %v725
    %v1543 = vunpack.c.l.b16 %v726
    %v1544 = vunpack.c.l.b16 %v727
    %v1545 = vunpack.c.l.b16 %v728
    %v1546 = vunpack.c.l.b16 %v729
    %v1547 = vunpack.c.l.b16 %v730
    %v1548 = vunpack.c.l.b16 %v731
    %v1549 = vunpack.c.l.b16 %v732
    %v1550 = vunpack.c.l.b16 %v733
    %v1551 = vunpack.c.l.b16 %v734
    %v1552 = vunpack.c.l.b16 %v735
    %v1553 = vunpack.c.l.b16 %v736
    %v1554 = vunpack.c.l.b16 %v737
    %v1555 = vunpack.c.l.b16 %v738
    %v1556 = vunpack.c.l.b16 %v739
    %v1557 = vunpack.c.l.b16 %v740
    %v1558 = vunpack.c.l.b16 %v741
    %v1559 = vunpack.c.l.b16 %v742
    %v1560 = vunpack.c.l.b16 %v743
    %v1561 = vunpack.c.l.b16 %v744
    %v1562 = vunpack.c.l.b16 %v745
    %v1563 = vunpack.c.l.b16 %v746
    %v1564 = vunpack.c.l.b16 %v747
    %v1565 = vunpack.c.l.b16 %v748
    %v1566 = vunpack.c.l.b16 %v749
    %v1567 = vunpack.c.l.b16 %v750
    %v1568 = vunpack.c.l.b16 %v751
    %v1569 = vunpack.c.l.b16 %v752
    %v1570 = vunpack.c.l.b16 %v753
    %v1571 = vunpack.c.l.b16 %v754
    %v1572 = vunpack.c.l.b16 %v755
    %v1573 = vunpack.c.l.b16 %v756
    %v1574 = vunpack.c.l.b16 %v757
    %v1575 = vunpack.c.l.b16 %v758
    %v1576 = vunpack.c.l.b16 %v759
    %v1577 = vunpack.c.l.b16 %v760
    %v1578 = vunpack.c.l.b16 %v761
    %v1579 = vunpack.c.l.b16 %v762
    %v1580 = vunpack.c.l.b16 %v763
    %v1581 = vunpack.c.l.b16 %v764
    %v1582 = vunpack.c.l.b16 %v765
    %v1583 = vunpack.c.l.b16 %v766
    %v1584 = vunpack.c.l.b16 %v767
    %v1585 = vunpack.c.l.b16 %v768
    %v1586 = vunpack.c.l.b16 %v769
    %v1587 = vunpack.c.l.b16 %v770
    %v1588 = vunpack.c.l.b16 %v771
    %v1589 = vunpack.c.l.b16 %v772
    %v1590 = vunpack.c.l.b16 %v773
    %v1591 = vunpack.c.l.b16 %v774
    %v1592 = vpack.c.b16 %v1188, %v1187
    %v1593 = vpack.c.b16 %v1190, %v1189
    %v1594 = vpack.c.b16 %v1192, %v1191
    %v1595 = vpack.c.b16 %v1194, %v1193
    %v1596 = vpack.c.b16 %v1196, %v1195
    %v1597 = vpack.c.b16 %v1198, %v1197
    %v1598 = vpack.c.b16 %v1200, %v1199
    %v1599 = vpack.c.b16 %v1202, %v1201
    %v1600 = vpack.c.b16 %v1204, %v1203
    %v1601 = vpack.c.b16 %v1206, %v1205
    %v1602 = vpack.c.b16 %v1208, %v1207
    %v1603 = vpack.c.b16 %v1210, %v1209
    %v1604 = vpack.c.b16 %v1212, %v1211
    %v1605 = vpack.c.b16 %v1214, %v1213
    %v1606 = vpack.c.b16 %v1216, %v1215
    %v1607 = vpack.c.b16 %v1218, %v1217
    %v1608 = vpack.c.b16 %v1220, %v1219
    %v1609 = vpack.c.b16 %v1222, %v1221
    %v1610 = vpack.c.b16 %v1224, %v1223
    %v1611 = vpack.c.b16 %v1226, %v1225
    %v1612 = vpack.c.b16 %v1228, %v1227
    %v1613 = vpack.c.b16 %v1230, %v1229
    %v1614 = vpack.c.b16 %v1232, %v1231
    %v1615 = vpack.c.b16 %v1234, %v1233
    %v1616 = vpack.c.b16 %v1236, %v1235
    %v1617 = vpack.c.b16 %v1238, %v1237
    %v1618 = vpack.c.b16 %v1240, %v1239
    %v1619 = vpack.c.b16 %v1242, %v1241
    %v1620 = vpack.c.b16 %v1244, %v1243
    %v1621 = vpack.c.b16 %v1246, %v1245
    %v1622 = vpack.c.b16 %v1248, %v1247
    %v1623 = vpack.c.b16 %v1250, %v1249
    %v1624 = vpack.c.b16 %v1252, %v1251
    %v1625 = vpack.c.b16 %v1254, %v1253
    %v1626 = vpack.c.b16 %v1256, %v1255
    %v1627 = vpack.c.b16 %v1258, %v1257
    %v1628 = vpack.c.b16 %v1260, %v1259
    %v1629 = vpack.c.b16 %v1262, %v1261
    %v1630 = vpack.c.b16 %v1264, %v1263
    %v1631 = vpack.c.b16 %v1266, %v1265
    %v1632 = vpack.c.b16 %v1268, %v1267
    %v1633 = vpack.c.b16 %v1270, %v1269
    %v1634 = vpack.c.b16 %v1272, %v1271
    %v1635 = vpack.c.b16 %v1274, %v1273
    %v1636 = vpack.c.b16 %v1276, %v1275
    %v1637 = vpack.c.b16 %v1278, %v1277
    %v1638 = vpack.c.b16 %v1280, %v1279
    %v1639 = vpack.c.b16 %v1282, %v1281
    %v1640 = vpack.c.b16 %v1284, %v1283
    %v1641 = vpack.c.b16 %v1286, %v1285
    %v1642 = vpack.c.b16 %v1288, %v1287
    %v1643 = vpack.c.b16 %v1290, %v1289
    %v1644 = vpack.c.b16 %v1292, %v1291
    %v1645 = vpack.c.b16 %v1294, %v1293
    %v1646 = vpack.c.b16 %v1296, %v1295
    %v1647 = vpack.c.b16 %v1298, %v1297
    %v1648 = vpack.c.b16 %v1300, %v1299
    %v1649 = vpack.c.b16 %v1302, %v1301
    %v1650 = vpack.c.b16 %v1304, %v1303
    %v1651 = vpack.c.b16 %v1306, %v1305
    %v1652 = vpack.c.b16 %v1308, %v1307
    %v1653 = vpack.c.b16 %v1310, %v1309
    %v1654 = vpack.c.b16 %v1312, %v1311
    %v1655 = vpack.c.b16 %v1314, %v1313
    %v1656 = vpack.c.b16 %v1316, %v1315
    %v1657 = vpack.c.b16 %v1318, %v1317
    %v1658 = vpack.c.b16 %v1320, %v1319
    %v1659 = vpack.c.b16 %v1322, %v1321
    %v1660 = vpack.c.b16 %v1324, %v1323
    %v1661 = vpack.c.b16 %v1326, %v1325
    %v1662 = vpack.c.b16 %v1328, %v1327
    %v1663 = vpack.c.b16 %v1330, %v1329
    %v1664 = vpack.c.b16 %v1332, %v1331
    %v1665 = vpack.c.b16 %v1334, %v1333
    %v1666 = vpack.c.b16 %v1336, %v1335
    %v1667 = vpack.c.b16 %v1338, %v1337
    %v1668 = vpack.c.b16 %v1340, %v1339
    %v1669 = vpack.c.b16 %v1342, %v1341
    %v1670 = vpack.c.b16 %v1344, %v1343
    %v1671 = vpack.c.b16 %v1346, %v1345
    %v1672 = vpack.c.b16 %v1348, %v1347
    %v1673 = vpack.c.b16 %v1350, %v1349
    %v1674 = vpack.c.b16 %v1352, %v1351
    %v1675 = vpack.c.b16 %v1354, %v1353
    %v1676 = vpack.c.b16 %v1356, %v1355
    %v1677 = vpack.c.b16 %v1358, %v1357
    %v1678 = vpack.c.b16 %v1360, %v1359
    %v1679 = vpack.c.b16 %v1362, %v1361
    %v1680 = vpack.c.b16 %v1364, %v1363
    %v1681 = vpack.c.b16 %v1366, %v1365
    %v1682 = vpack.c.b16 %v1368, %v1367
    %v1683 = vpack.c.b16 %v1370, %v1369
    %v1684 = vpack.c.b16 %v1372, %v1371
    %v1685 = vpack.c.b16 %v1374, %v1373
    %v1686 = vpack.c.b16 %v1376, %v1375
    %v1687 = vpack.c.b16 %v1378, %v1377
    %v1688 = vpack.c.b16 %v1380, %v1379
    %v1689 = vpack.c.b16 %v1382, %v1381
    %v1690 = vpack.c.b16 %v1384, %v1383
    %v1691 = vpack.c.b16 %v1386, %v1385
    %v1692 = vpack.c.b16 %v1388, %v1387
    %v1693 = vpack.c.b16 %v1390, %v1389
    %v1694 = vpack.c.b16 %v1392, %v1391
    %v1695 = vpack.c.b16 %v1394, %v1393
    %v1696 = vpack.c.b16 %v1396, %v1395
    %v1697 = vpack.c.b16 %v1398, %v1397
    %v1698 = vpack.c.b16 %v1400, %v1399
    %v1699 = vpack.c.b16 %v1402, %v1401
    %v1700 = vpack.c.b16 %v1404, %v1403
    %v1701 = vpack.c.b16 %v1406, %v1405
    %v1702 = vpack.c.b16 %v1408, %v1407
    %v1703 = vpack.c.b16 %v1410, %v1409
    %v1704 = vpack.c.b16 %v1412, %v1411
    %v1705 = vpack.c.b16 %v1414, %v1413
    %v1706 = vpack.c.b16 %v1416, %v1415
    %v1707 = vpack.c.b16 %v1418, %v1417
    %v1708 = vpack.c.b16 %v1420, %v1419
    %v1709 = vpack.c.b16 %v1422, %v1421
    %v1710 = vpack.c.b16 %v1424, %v1423
    %v1711 = vpack.c.b16 %v1426, %v1425
    %v1712 = vpack.c.b16 %v1428, %v1427
    %v1713 = vpack.c.b16 %v1430, %v1429
    %v1714 = vpack.c.b16 %v1432, %v1431
    %v1715 = vpack.c.b16 %v1434, %v1433
    %v1716 = vpack.c.b16 %v1436, %v1435
    %v1717 = vpack.c.b16 %v1438, %v1437
    %v1718 = vpack.c.b16 %v1440, %v1439
    %v1719 = vpack.c.b16 %v1442, %v1441
    %v1720 = vpack.c.b16 %v1444, %v1443
    %v1721 = vpack.c.b16 %v1446, %v1445
    %v1722 = vpack.c.b16 %v1448, %v1447
    %v1723 = vpack.c.b16 %v1450, %v1449
    %v1724 = vpack.c.b16 %v1452, %v1451
    %v1725 = vpack.c.b16 %v1454, %v1453
    %v1726 = vpack.c.b16 %v1456, %v1455
    %v1727 = vpack.c.b16 %v1458, %v1457
    %v1728 = vpack.c.b16 %v1460, %v1459
    %v1729 = vpack.c.b16 %v1462, %v1461
    %v1730 = vpack.c.b16 %v1464, %v1463
    %v1731 = vpack.c.b16 %v1466, %v1465
    %v1732 = vpack.c.b16 %v1468, %v1467
    %v1733 = vpack.c.b16 %v1470, %v1469
    %v1734 = vpack.c.b16 %v1472, %v1471
    %v1735 = vpack.c.b16 %v1474, %v1473
    %v1736 = vpack.c.b16 %v1476, %v1475
    %v1737 = vpack.c.b16 %v1478, %v1477
    %v1738 = vpack.c.b16 %v1480, %v1479
    %v1739 = vpack.c.b16 %v1482, %v1481
    %v1740 = vpack.c.b16 %v1484, %v1483
    %v1741 = vpack.c.b16 %v1486, %v1485
    %v1742 = vpack.c.b16 %v1488, %v1487
    %v1743 = vpack.c.b16 %v1490, %v1489
    %v1744 = vpack.c.b16 %v1492, %v1491
    %v1745 = vpack.c.b16 %v1494, %v1493
    %v1746 = vpack.c.b16 %v1496, %v1495
    %v1747 = vpack.c.b16 %v1498, %v1497
    %v1748 = vpack.c.b16 %v1500, %v1499
    %v1749 = vpack.c.b16 %v1502, %v1501
    %v1750 = vpack.c.b16 %v1504, %v1503
    %v1751 = vpack.c.b16 %v1506, %v1505
    %v1752 = vpack.c.b16 %v1508, %v1507
    %v1753 = vpack.c.b16 %v1510, %v1509
    %v1754 = vpack.c.b16 %v1512, %v1511
    %v1755 = vpack.c.b16 %v1514, %v1513
    %v1756 = vpack.c.b16 %v1516, %v1515
    %v1757 = vpack.c.b16 %v1518, %v1517
    %v1758 = vpack.c.b16 %v1520, %v1519
    %v1759 = vpack.c.b16 %v1522, %v1521
    %v1760 = vpack.c.b16 %v1524, %v1523
    %v1761 = vpack.c.b16 %v1526, %v1525
    %v1762 = vpack.c.b16 %v1528, %v1527
    %v1763 = vpack.c.b16 %v1530, %v1529
    %v1764 = vpack.c.b16 %v1532, %v1531
    %v1765 = vpack.c.b16 %v1534, %v1533
    %v1766 = vpack.c.b16 %v1536, %v1535
    %v1767 = vpack.c.b16 %v1538, %v1537
    %v1768 = vpack.c.b16 %v1540, %v1539
    %v1769 = vpack.c.b16 %v1542, %v1541
    %v1770 = vpack.c.b16 %v1544, %v1543
    %v1771 = vpack.c.b16 %v1546, %v1545
    %v1772 = vpack.c.b16 %v1548, %v1547
    %v1773 = vpack.c.b16 %v1550, %v1549
    %v1774 = vpack.c.b16 %v1552, %v1551
    %v1775 = vpack.c.b16 %v1554, %v1553
    %v1776 = vpack.c.b16 %v1556, %v1555
    %v1777 = vpack.c.b16 %v1558, %v1557
    %v1778 = vpack.c.b16 %v1560, %v1559
    %v1779 = vpack.c.b16 %v1562, %v1561
    %v1780 = vpack.c.b16 %v1564, %v1563
    %v1781 = vpack.c.b16 %v1566, %v1565
    %v1782 = vpack.c.b16 %v1568, %v1567
    %v1783 = vpack.c.b16 %v1570, %v1569
    %v1784 = vpack.c.b16 %v1572, %v1571
    %v1785 = vpack.c.b16 %v1574, %v1573
    %v1786 = vpack.c.b16 %v1576, %v1575
    %v1787 = vpack.c.b16 %v1578, %v1577
    %v1788 = vpack.c.b16 %v1580, %v1579
    %v1789 = vpack.c.b16 %v1582, %v1581
    %v1790 = vpack.c.b16 %v1584, %v1583
    %v1791 = vpack.c.b16 %v1586, %v1585
    %v1792 = vpack.c.b16 %v1588, %v1587
    %v1793 = vpack.c.b16 %v1590, %v1589
    %v1794 = vpack.c.b16 %v1591, %v1591
    %vm1997 = vcmask 326656
    %v1999 = vsel %vm1997, %v369, 0
    %vm2001 = vcmask 1043456
    %v2003 = vsel %vm2001, %v1794, 0
    %2005 = vmatprep.subr.bf16.mxu0 0
    %2006 = vmatpush1.bf16.msra.mxu0 %v1592
    %2007 = vmatprep.subr.bf16.mxu0 0
    %2008 = vmatpush1.bf16.msra.mxu0 %v1593
    %2009 = vmatprep.subr.bf16.mxu0 0
    %2010 = vmatpush1.bf16.msra.mxu0 %v1594
    %2011 = vmatprep.subr.bf16.mxu0 0
    %2012 = vmatpush1.bf16.msra.mxu0 %v1595
    %2013 = vmatprep.subr.bf16.mxu0 0
    %2014 = vmatpush1.bf16.msra.mxu0 %v1596
    %2015 = vmatprep.subr.bf16.mxu0 0
    %2016 = vmatpush1.bf16.msra.mxu0 %v1597
    %2017 = vmatprep.subr.bf16.mxu0 0
    %2018 = vmatpush1.bf16.msra.mxu0 %v1598
    %2019 = vmatprep.subr.bf16.mxu0 0
    %2020 = vmatpush1.bf16.msra.mxu0 %v1599
    %2021 = vmatprep.subr.bf16.mxu0 0
    %2022 = vmatpush1.bf16.msra.mxu0 %v1600
    %2023 = vmatprep.subr.bf16.mxu0 0
    %2024 = vmatpush1.bf16.msra.mxu0 %v1601
    %2025 = vmatprep.subr.bf16.mxu0 0
    %2026 = vmatpush1.bf16.msra.mxu0 %v1602
    %2027 = vmatprep.subr.bf16.mxu0 0
    %2028 = vmatpush1.bf16.msra.mxu0 %v1603
    %2029 = vmatprep.subr.bf16.mxu0 0
    %2030 = vmatpush1.bf16.msra.mxu0 %v1604
    %2031 = vmatprep.subr.bf16.mxu0 0
    %2032 = vmatpush1.bf16.msra.mxu0 %v1605
    %2033 = vmatprep.subr.bf16.mxu0 0
    %2034 = vmatpush1.bf16.msra.mxu0 %v1606
    %2035 = vmatprep.subr.bf16.mxu0 0
    %2036 = vmatpush1.bf16.msra.mxu0 %v1607
    %2037 = vmatprep.mubr.bf16.mxu0 %v345
    %2038 = vmatmul.mubr.bf16.gmra.mrb[0].mxu0 %v344
    %v2039 = vpop.f32.mrb[0].mxu0
    %v2040 = vadd.f32 %v780, %v2039
    %v2041 = vpop.f32.mrb[0].mxu0
    %v2042 = vpop.f32.mrb[0].mxu0
    %v2043 = vpop.f32.mrb[0].mxu0
    %2044 = vdwg.mxu0
    %2045 = vmatprep.subr.bf16.mxu0 0
    %2046 = vmatpush1.bf16.msra.mxu0 %v1608
    %2047 = vmatprep.subr.bf16.mxu0 0
    %2048 = vmatpush1.bf16.msra.mxu0 %v1609
    %2049 = vmatprep.subr.bf16.mxu0 0
    %2050 = vmatpush1.bf16.msra.mxu0 %v1610
    %2051 = vmatprep.subr.bf16.mxu0 0
    %2052 = vmatpush1.bf16.msra.mxu0 %v1611
    %2053 = vmatprep.subr.bf16.mxu0 0
    %2054 = vmatpush1.bf16.msra.mxu0 %v1612
    %2055 = vmatprep.subr.bf16.mxu0 0
    %2056 = vmatpush1.bf16.msra.mxu0 %v1613
    %2057 = vmatprep.subr.bf16.mxu0 0
    %2058 = vmatpush1.bf16.msra.mxu0 %v1614
    %2059 = vmatprep.subr.bf16.mxu0 0
    %2060 = vmatpush1.bf16.msra.mxu0 %v1615
    %2061 = vmatprep.subr.bf16.mxu0 0
    %2062 = vmatpush1.bf16.msra.mxu0 %v1616
    %2063 = vmatprep.subr.bf16.mxu0 0
    %2064 = vmatpush1.bf16.msra.mxu0 %v1617
    %2065 = vmatprep.subr.bf16.mxu0 0
    %2066 = vmatpush1.bf16.msra.mxu0 %v1618
    %2067 = vmatprep.subr.bf16.mxu0 0
    %2068 = vmatpush1.bf16.msra.mxu0 %v1619
    %2069 = vmatprep.subr.bf16.mxu0 0
    %2070 = vmatpush1.bf16.msra.mxu0 %v1620
    %2071 = vmatprep.subr.bf16.mxu0 0
    %2072 = vmatpush1.bf16.msra.mxu0 %v1621
    %2073 = vmatprep.subr.bf16.mxu0 0
    %2074 = vmatpush1.bf16.msra.mxu0 %v1622
    %2075 = vmatprep.subr.bf16.mxu0 0
    %2076 = vmatpush1.bf16.msra.mxu0 %v1623
    %2077 = vmatprep.mubr.bf16.mxu0 %v347
    %2078 = vmatmul.mubr.bf16.gmra.mrb[0].mxu0 %v346
    %v2079 = vpop.f32.mrb[0].mxu0
    %v2080 = vadd.f32 %v2040, %v2079
    %v2081 = vpop.f32.mrb[0].mxu0
    %v2082 = vpop.f32.mrb[0].mxu0
    %v2083 = vpop.f32.mrb[0].mxu0
    %2084 = vdwg.mxu0
    %2085 = vmatprep.subr.bf16.mxu0 0
    %2086 = vmatpush1.bf16.msra.mxu0 %v1624
    %2087 = vmatprep.subr.bf16.mxu0 0
    %2088 = vmatpush1.bf16.msra.mxu0 %v1625
    %2089 = vmatprep.subr.bf16.mxu0 0
    %2090 = vmatpush1.bf16.msra.mxu0 %v1626
    %2091 = vmatprep.subr.bf16.mxu0 0
    %2092 = vmatpush1.bf16.msra.mxu0 %v1627
    %2093 = vmatprep.subr.bf16.mxu0 0
    %2094 = vmatpush1.bf16.msra.mxu0 %v1628
    %2095 = vmatprep.subr.bf16.mxu0 0
    %2096 = vmatpush1.bf16.msra.mxu0 %v1629
    %2097 = vmatprep.subr.bf16.mxu0 0
    %2098 = vmatpush1.bf16.msra.mxu0 %v1630
    %2099 = vmatprep.subr.bf16.mxu0 0
    %2100 = vmatpush1.bf16.msra.mxu0 %v1631
    %2101 = vmatprep.subr.bf16.mxu0 0
    %2102 = vmatpush1.bf16.msra.mxu0 %v1632
    %2103 = vmatprep.subr.bf16.mxu0 0
    %2104 = vmatpush1.bf16.msra.mxu0 %v1633
    %2105 = vmatprep.subr.bf16.mxu0 0
    %2106 = vmatpush1.bf16.msra.mxu0 %v1634
    %2107 = vmatprep.subr.bf16.mxu0 0
    %2108 = vmatpush1.bf16.msra.mxu0 %v1635
    %2109 = vmatprep.subr.bf16.mxu0 0
    %2110 = vmatpush1.bf16.msra.mxu0 %v1636
    %2111 = vmatprep.subr.bf16.mxu0 0
    %2112 = vmatpush1.bf16.msra.mxu0 %v1637
    %2113 = vmatprep.subr.bf16.mxu0 0
    %2114 = vmatpush1.bf16.msra.mxu0 %v1638
    %2115 = vmatprep.subr.bf16.mxu0 0
    %2116 = vmatpush1.bf16.msra.mxu0 %v1639
    %2117 = vmatprep.mubr.bf16.mxu0 %v349
    %2118 = vmatmul.mubr.bf16.gmra.mrb[0].mxu0 %v348
    %v2119 = vpop.f32.mrb[0].mxu0
    %v2120 = vadd.f32 %v2080, %v2119
    %v2121 = vpop.f32.mrb[0].mxu0
    %v2122 = vpop.f32.mrb[0].mxu0
    %v2123 = vpop.f32.mrb[0].mxu0
    %2124 = vdwg.mxu0
    %2125 = vmatprep.subr.bf16.mxu0 0
    %2126 = vmatpush1.bf16.msra.mxu0 %v1640
    %2127 = vmatprep.subr.bf16.mxu0 0
    %2128 = vmatpush1.bf16.msra.mxu0 %v1641
    %2129 = vmatprep.subr.bf16.mxu0 0
    %2130 = vmatpush1.bf16.msra.mxu0 %v1642
    %2131 = vmatprep.subr.bf16.mxu0 0
    %2132 = vmatpush1.bf16.msra.mxu0 %v1643
    %2133 = vmatprep.subr.bf16.mxu0 0
    %2134 = vmatpush1.bf16.msra.mxu0 %v1644
    %2135 = vmatprep.subr.bf16.mxu0 0
    %2136 = vmatpush1.bf16.msra.mxu0 %v1645
    %2137 = vmatprep.subr.bf16.mxu0 0
    %2138 = vmatpush1.bf16.msra.mxu0 %v1646
    %2139 = vmatprep.subr.bf16.mxu0 0
    %2140 = vmatpush1.bf16.msra.mxu0 %v1647
    %2141 = vmatprep.subr.bf16.mxu0 0
    %2142 = vmatpush1.bf16.msra.mxu0 %v1648
    %2143 = vmatprep.subr.bf16.mxu0 0
    %2144 = vmatpush1.bf16.msra.mxu0 %v1649
    %2145 = vmatprep.subr.bf16.mxu0 0
    %2146 = vmatpush1.bf16.msra.mxu0 %v1650
    %2147 = vmatprep.subr.bf16.mxu0 0
    %2148 = vmatpush1.bf16.msra.mxu0 %v1651
    %2149 = vmatprep.subr.bf16.mxu0 0
    %2150 = vmatpush1.bf16.msra.mxu0 %v1652
    %2151 = vmatprep.subr.bf16.mxu0 0
    %2152 = vmatpush1.bf16.msra.mxu0 %v1653
    %2153 = vmatprep.subr.bf16.mxu0 0
    %2154 = vmatpush1.bf16.msra.mxu0 %v1654
    %2155 = vmatprep.subr.bf16.mxu0 0
    %2156 = vmatpush1.bf16.msra.mxu0 %v1655
    %2157 = vmatprep.mubr.bf16.mxu0 %v351
    %2158 = vmatmul.mubr.bf16.gmra.mrb[0].mxu0 %v350
    %v2159 = vpop.f32.mrb[0].mxu0
    %v2160 = vadd.f32 %v2120, %v2159
    %v2161 = vpop.f32.mrb[0].mxu0
    %v2162 = vpop.f32.mrb[0].mxu0
    %v2163 = vpop.f32.mrb[0].mxu0
    %2164 = vdwg.mxu0
    %2165 = vmatprep.subr.bf16.mxu0 0
    %2166 = vmatpush1.bf16.msra.mxu0 %v1656
    %2167 = vmatprep.subr.bf16.mxu0 0
    %2168 = vmatpush1.bf16.msra.mxu0 %v1657
    %2169 = vmatprep.subr.bf16.mxu0 0
    %2170 = vmatpush1.bf16.msra.mxu0 %v1658
    %2171 = vmatprep.subr.bf16.mxu0 0
    %2172 = vmatpush1.bf16.msra.mxu0 %v1659
    %2173 = vmatprep.subr.bf16.mxu0 0
    %2174 = vmatpush1.bf16.msra.mxu0 %v1660
    %2175 = vmatprep.subr.bf16.mxu0 0
    %2176 = vmatpush1.bf16.msra.mxu0 %v1661
    %2177 = vmatprep.subr.bf16.mxu0 0
    %2178 = vmatpush1.bf16.msra.mxu0 %v1662
    %2179 = vmatprep.subr.bf16.mxu0 0
    %2180 = vmatpush1.bf16.msra.mxu0 %v1663
    %2181 = vmatprep.subr.bf16.mxu0 0
    %2182 = vmatpush1.bf16.msra.mxu0 %v1664
    %2183 = vmatprep.subr.bf16.mxu0 0
    %2184 = vmatpush1.bf16.msra.mxu0 %v1665
    %2185 = vmatprep.subr.bf16.mxu0 0
    %2186 = vmatpush1.bf16.msra.mxu0 %v1666
    %2187 = vmatprep.subr.bf16.mxu0 0
    %2188 = vmatpush1.bf16.msra.mxu0 %v1667
    %2189 = vmatprep.subr.bf16.mxu0 0
    %2190 = vmatpush1.bf16.msra.mxu0 %v1668
    %2191 = vmatprep.subr.bf16.mxu0 0
    %2192 = vmatpush1.bf16.msra.mxu0 %v1669
    %2193 = vmatprep.subr.bf16.mxu0 0
    %2194 = vmatpush1.bf16.msra.mxu0 %v1670
    %2195 = vmatprep.subr.bf16.mxu0 0
    %2196 = vmatpush1.bf16.msra.mxu0 %v1671
    %2197 = vmatprep.mubr.bf16.mxu0 %v353
    %2198 = vmatmul.mubr.bf16.gmra.mrb[0].mxu0 %v352
    %v2199 = vpop.f32.mrb[0].mxu0
    %v2200 = vadd.f32 %v2160, %v2199
    %v2201 = vpop.f32.mrb[0].mxu0
    %v2202 = vpop.f32.mrb[0].mxu0
    %v2203 = vpop.f32.mrb[0].mxu0
    %2204 = vdwg.mxu0
    %2205 = vmatprep.subr.bf16.mxu0 0
    %2206 = vmatpush1.bf16.msra.mxu0 %v1672
    %2207 = vmatprep.subr.bf16.mxu0 0
    %2208 = vmatpush1.bf16.msra.mxu0 %v1673
    %2209 = vmatprep.subr.bf16.mxu0 0
    %2210 = vmatpush1.bf16.msra.mxu0 %v1674
    %2211 = vmatprep.subr.bf16.mxu0 0
    %2212 = vmatpush1.bf16.msra.mxu0 %v1675
    %2213 = vmatprep.subr.bf16.mxu0 0
    %2214 = vmatpush1.bf16.msra.mxu0 %v1676
    %2215 = vmatprep.subr.bf16.mxu0 0
    %2216 = vmatpush1.bf16.msra.mxu0 %v1677
    %2217 = vmatprep.subr.bf16.mxu0 0
    %2218 = vmatpush1.bf16.msra.mxu0 %v1678
    %2219 = vmatprep.subr.bf16.mxu0 0
    %2220 = vmatpush1.bf16.msra.mxu0 %v1679
    %2221 = vmatprep.subr.bf16.mxu0 0
    %2222 = vmatpush1.bf16.msra.mxu0 %v1680
    %2223 = vmatprep.subr.bf16.mxu0 0
    %2224 = vmatpush1.bf16.msra.mxu0 %v1681
    %2225 = vmatprep.subr.bf16.mxu0 0
    %2226 = vmatpush1.bf16.msra.mxu0 %v1682
    %2227 = vmatprep.subr.bf16.mxu0 0
    %2228 = vmatpush1.bf16.msra.mxu0 %v1683
    %2229 = vmatprep.subr.bf16.mxu0 0
    %2230 = vmatpush1.bf16.msra.mxu0 %v1684
    %2231 = vmatprep.subr.bf16.mxu0 0
    %2232 = vmatpush1.bf16.msra.mxu0 %v1685
    %2233 = vmatprep.subr.bf16.mxu0 0
    %2234 = vmatpush1.bf16.msra.mxu0 %v1686
    %2235 = vmatprep.subr.bf16.mxu0 0
    %2236 = vmatpush1.bf16.msra.mxu0 %v1687
    %2237 = vmatprep.mubr.bf16.mxu0 %v355
    %2238 = vmatmul.mubr.bf16.gmra.mrb[0].mxu0 %v354
    %v2239 = vpop.f32.mrb[0].mxu0
    %v2240 = vadd.f32 %v2200, %v2239
    %v2241 = vpop.f32.mrb[0].mxu0
    %v2242 = vpop.f32.mrb[0].mxu0
    %v2243 = vpop.f32.mrb[0].mxu0
    %2244 = vdwg.mxu0
    %2245 = vmatprep.subr.bf16.mxu0 0
    %2246 = vmatpush1.bf16.msra.mxu0 %v1688
    %2247 = vmatprep.subr.bf16.mxu0 0
    %2248 = vmatpush1.bf16.msra.mxu0 %v1689
    %2249 = vmatprep.subr.bf16.mxu0 0
    %2250 = vmatpush1.bf16.msra.mxu0 %v1690
    %2251 = vmatprep.subr.bf16.mxu0 0
    %2252 = vmatpush1.bf16.msra.mxu0 %v1691
    %2253 = vmatprep.subr.bf16.mxu0 0
    %2254 = vmatpush1.bf16.msra.mxu0 %v1692
    %2255 = vmatprep.subr.bf16.mxu0 0
    %2256 = vmatpush1.bf16.msra.mxu0 %v1693
    %2257 = vmatprep.subr.bf16.mxu0 0
    %2258 = vmatpush1.bf16.msra.mxu0 %v1694
    %2259 = vmatprep.subr.bf16.mxu0 0
    %2260 = vmatpush1.bf16.msra.mxu0 %v1695
    %2261 = vmatprep.subr.bf16.mxu0 0
    %2262 = vmatpush1.bf16.msra.mxu0 %v1696
    %2263 = vmatprep.subr.bf16.mxu0 0
    %2264 = vmatpush1.bf16.msra.mxu0 %v1697
    %2265 = vmatprep.subr.bf16.mxu0 0
    %2266 = vmatpush1.bf16.msra.mxu0 %v1698
    %2267 = vmatprep.subr.bf16.mxu0 0
    %2268 = vmatpush1.bf16.msra.mxu0 %v1699
    %2269 = vmatprep.subr.bf16.mxu0 0
    %2270 = vmatpush1.bf16.msra.mxu0 %v1700
    %2271 = vmatprep.subr.bf16.mxu0 0
    %2272 = vmatpush1.bf16.msra.mxu0 %v1701
    %2273 = vmatprep.subr.bf16.mxu0 0
    %2274 = vmatpush1.bf16.msra.mxu0 %v1702
    %2275 = vmatprep.subr.bf16.mxu0 0
    %2276 = vmatpush1.bf16.msra.mxu0 %v1703
    %2277 = vmatprep.mubr.bf16.mxu0 %v357
    %2278 = vmatmul.mubr.bf16.gmra.mrb[0].mxu0 %v356
    %v2279 = vpop.f32.mrb[0].mxu0
    %v2280 = vadd.f32 %v2240, %v2279
    %v2281 = vpop.f32.mrb[0].mxu0
    %v2282 = vpop.f32.mrb[0].mxu0
    %v2283 = vpop.f32.mrb[0].mxu0
    %2284 = vdwg.mxu0
    %2285 = vmatprep.subr.bf16.mxu0 0
    %2286 = vmatpush1.bf16.msra.mxu0 %v1704
    %2287 = vmatprep.subr.bf16.mxu0 0
    %2288 = vmatpush1.bf16.msra.mxu0 %v1705
    %2289 = vmatprep.subr.bf16.mxu0 0
    %2290 = vmatpush1.bf16.msra.mxu0 %v1706
    %2291 = vmatprep.subr.bf16.mxu0 0
    %2292 = vmatpush1.bf16.msra.mxu0 %v1707
    %2293 = vmatprep.subr.bf16.mxu0 0
    %2294 = vmatpush1.bf16.msra.mxu0 %v1708
    %2295 = vmatprep.subr.bf16.mxu0 0
    %2296 = vmatpush1.bf16.msra.mxu0 %v1709
    %2297 = vmatprep.subr.bf16.mxu0 0
    %2298 = vmatpush1.bf16.msra.mxu0 %v1710
    %2299 = vmatprep.subr.bf16.mxu0 0
    %2300 = vmatpush1.bf16.msra.mxu0 %v1711
    %2301 = vmatprep.subr.bf16.mxu0 0
    %2302 = vmatpush1.bf16.msra.mxu0 %v1712
    %2303 = vmatprep.subr.bf16.mxu0 0
    %2304 = vmatpush1.bf16.msra.mxu0 %v1713
    %2305 = vmatprep.subr.bf16.mxu0 0
    %2306 = vmatpush1.bf16.msra.mxu0 %v1714
    %2307 = vmatprep.subr.bf16.mxu0 0
    %2308 = vmatpush1.bf16.msra.mxu0 %v1715
    %2309 = vmatprep.subr.bf16.mxu0 0
    %2310 = vmatpush1.bf16.msra.mxu0 %v1716
    %2311 = vmatprep.subr.bf16.mxu0 0
    %2312 = vmatpush1.bf16.msra.mxu0 %v1717
    %2313 = vmatprep.subr.bf16.mxu0 0
    %2314 = vmatpush1.bf16.msra.mxu0 %v1718
    %2315 = vmatprep.subr.bf16.mxu0 0
    %2316 = vmatpush1.bf16.msra.mxu0 %v1719
    %2317 = vmatprep.mubr.bf16.mxu0 %v359
    %2318 = vmatmul.mubr.bf16.gmra.mrb[0].mxu0 %v358
    %v2319 = vpop.f32.mrb[0].mxu0
    %v2320 = vadd.f32 %v2280, %v2319
    %v2321 = vpop.f32.mrb[0].mxu0
    %v2322 = vpop.f32.mrb[0].mxu0
    %v2323 = vpop.f32.mrb[0].mxu0
    %2324 = vdwg.mxu0
    %2325 = vmatprep.subr.bf16.mxu0 0
    %2326 = vmatpush1.bf16.msra.mxu0 %v1720
    %2327 = vmatprep.subr.bf16.mxu0 0
    %2328 = vmatpush1.bf16.msra.mxu0 %v1721
    %2329 = vmatprep.subr.bf16.mxu0 0
    %2330 = vmatpush1.bf16.msra.mxu0 %v1722
    %2331 = vmatprep.subr.bf16.mxu0 0
    %2332 = vmatpush1.bf16.msra.mxu0 %v1723
    %2333 = vmatprep.subr.bf16.mxu0 0
    %2334 = vmatpush1.bf16.msra.mxu0 %v1724
    %2335 = vmatprep.subr.bf16.mxu0 0
    %2336 = vmatpush1.bf16.msra.mxu0 %v1725
    %2337 = vmatprep.subr.bf16.mxu0 0
    %2338 = vmatpush1.bf16.msra.mxu0 %v1726
    %2339 = vmatprep.subr.bf16.mxu0 0
    %2340 = vmatpush1.bf16.msra.mxu0 %v1727
    %2341 = vmatprep.subr.bf16.mxu0 0
    %2342 = vmatpush1.bf16.msra.mxu0 %v1728
    %2343 = vmatprep.subr.bf16.mxu0 0
    %2344 = vmatpush1.bf16.msra.mxu0 %v1729
    %2345 = vmatprep.subr.bf16.mxu0 0
    %2346 = vmatpush1.bf16.msra.mxu0 %v1730
    %2347 = vmatprep.subr.bf16.mxu0 0
    %2348 = vmatpush1.bf16.msra.mxu0 %v1731
    %2349 = vmatprep.subr.bf16.mxu0 0
    %2350 = vmatpush1.bf16.msra.mxu0 %v1732
    %2351 = vmatprep.subr.bf16.mxu0 0
    %2352 = vmatpush1.bf16.msra.mxu0 %v1733
    %2353 = vmatprep.subr.bf16.mxu0 0
    %2354 = vmatpush1.bf16.msra.mxu0 %v1734
    %2355 = vmatprep.subr.bf16.mxu0 0
    %2356 = vmatpush1.bf16.msra.mxu0 %v1735
    %2357 = vmatprep.mubr.bf16.mxu0 %v361
    %2358 = vmatmul.mubr.bf16.gmra.mrb[0].mxu0 %v360
    %v2359 = vpop.f32.mrb[0].mxu0
    %v2360 = vadd.f32 %v2320, %v2359
    %v2361 = vpop.f32.mrb[0].mxu0
    %v2362 = vpop.f32.mrb[0].mxu0
    %v2363 = vpop.f32.mrb[0].mxu0
    %2364 = vdwg.mxu0
    %2365 = vmatprep.subr.bf16.mxu0 0
    %2366 = vmatpush1.bf16.msra.mxu0 %v1736
    %2367 = vmatprep.subr.bf16.mxu0 0
    %2368 = vmatpush1.bf16.msra.mxu0 %v1737
    %2369 = vmatprep.subr.bf16.mxu0 0
    %2370 = vmatpush1.bf16.msra.mxu0 %v1738
    %2371 = vmatprep.subr.bf16.mxu0 0
    %2372 = vmatpush1.bf16.msra.mxu0 %v1739
    %2373 = vmatprep.subr.bf16.mxu0 0
    %2374 = vmatpush1.bf16.msra.mxu0 %v1740
    %2375 = vmatprep.subr.bf16.mxu0 0
    %2376 = vmatpush1.bf16.msra.mxu0 %v1741
    %2377 = vmatprep.subr.bf16.mxu0 0
    %2378 = vmatpush1.bf16.msra.mxu0 %v1742
    %2379 = vmatprep.subr.bf16.mxu0 0
    %2380 = vmatpush1.bf16.msra.mxu0 %v1743
    %2381 = vmatprep.subr.bf16.mxu0 0
    %2382 = vmatpush1.bf16.msra.mxu0 %v1744
    %2383 = vmatprep.subr.bf16.mxu0 0
    %2384 = vmatpush1.bf16.msra.mxu0 %v1745
    %2385 = vmatprep.subr.bf16.mxu0 0
    %2386 = vmatpush1.bf16.msra.mxu0 %v1746
    %2387 = vmatprep.subr.bf16.mxu0 0
    %2388 = vmatpush1.bf16.msra.mxu0 %v1747
    %2389 = vmatprep.subr.bf16.mxu0 0
    %2390 = vmatpush1.bf16.msra.mxu0 %v1748
    %2391 = vmatprep.subr.bf16.mxu0 0
    %2392 = vmatpush1.bf16.msra.mxu0 %v1749
    %2393 = vmatprep.subr.bf16.mxu0 0
    %2394 = vmatpush1.bf16.msra.mxu0 %v1750
    %2395 = vmatprep.subr.bf16.mxu0 0
    %2396 = vmatpush1.bf16.msra.mxu0 %v1751
    %2397 = vmatprep.mubr.bf16.mxu0 %v363
    %2398 = vmatmul.mubr.bf16.gmra.mrb[0].mxu0 %v362
    %v2399 = vpop.f32.mrb[0].mxu0
    %v2400 = vadd.f32 %v2360, %v2399
    %v2401 = vpop.f32.mrb[0].mxu0
    %v2402 = vpop.f32.mrb[0].mxu0
    %v2403 = vpop.f32.mrb[0].mxu0
    %2404 = vdwg.mxu0
    %2405 = vmatprep.subr.bf16.mxu0 0
    %2406 = vmatpush1.bf16.msra.mxu0 %v1752
    %2407 = vmatprep.subr.bf16.mxu0 0
    %2408 = vmatpush1.bf16.msra.mxu0 %v1753
    %2409 = vmatprep.subr.bf16.mxu0 0
    %2410 = vmatpush1.bf16.msra.mxu0 %v1754
    %2411 = vmatprep.subr.bf16.mxu0 0
    %2412 = vmatpush1.bf16.msra.mxu0 %v1755
    %2413 = vmatprep.subr.bf16.mxu0 0
    %2414 = vmatpush1.bf16.msra.mxu0 %v1756
    %2415 = vmatprep.subr.bf16.mxu0 0
    %2416 = vmatpush1.bf16.msra.mxu0 %v1757
    %2417 = vmatprep.subr.bf16.mxu0 0
    %2418 = vmatpush1.bf16.msra.mxu0 %v1758
    %2419 = vmatprep.subr.bf16.mxu0 0
    %2420 = vmatpush1.bf16.msra.mxu0 %v1759
    %2421 = vmatprep.subr.bf16.mxu0 0
    %2422 = vmatpush1.bf16.msra.mxu0 %v1760
    %2423 = vmatprep.subr.bf16.mxu0 0
    %2424 = vmatpush1.bf16.msra.mxu0 %v1761
    %2425 = vmatprep.subr.bf16.mxu0 0
    %2426 = vmatpush1.bf16.msra.mxu0 %v1762
    %2427 = vmatprep.subr.bf16.mxu0 0
    %2428 = vmatpush1.bf16.msra.mxu0 %v1763
    %2429 = vmatprep.subr.bf16.mxu0 0
    %2430 = vmatpush1.bf16.msra.mxu0 %v1764
    %2431 = vmatprep.subr.bf16.mxu0 0
    %2432 = vmatpush1.bf16.msra.mxu0 %v1765
    %2433 = vmatprep.subr.bf16.mxu0 0
    %2434 = vmatpush1.bf16.msra.mxu0 %v1766
    %2435 = vmatprep.subr.bf16.mxu0 0
    %2436 = vmatpush1.bf16.msra.mxu0 %v1767
    %2437 = vmatprep.mubr.bf16.mxu0 %v365
    %2438 = vmatmul.mubr.bf16.gmra.mrb[0].mxu0 %v364
    %v2439 = vpop.f32.mrb[0].mxu0
    %v2440 = vadd.f32 %v2400, %v2439
    %v2441 = vpop.f32.mrb[0].mxu0
    %v2442 = vpop.f32.mrb[0].mxu0
    %v2443 = vpop.f32.mrb[0].mxu0
    %2444 = vdwg.mxu0
    %2445 = vmatprep.subr.bf16.mxu0 0
    %2446 = vmatpush1.bf16.msra.mxu0 %v1768
    %2447 = vmatprep.subr.bf16.mxu0 0
    %2448 = vmatpush1.bf16.msra.mxu0 %v1769
    %2449 = vmatprep.subr.bf16.mxu0 0
    %2450 = vmatpush1.bf16.msra.mxu0 %v1770
    %2451 = vmatprep.subr.bf16.mxu0 0
    %2452 = vmatpush1.bf16.msra.mxu0 %v1771
    %2453 = vmatprep.subr.bf16.mxu0 0
    %2454 = vmatpush1.bf16.msra.mxu0 %v1772
    %2455 = vmatprep.subr.bf16.mxu0 0
    %2456 = vmatpush1.bf16.msra.mxu0 %v1773
    %2457 = vmatprep.subr.bf16.mxu0 0
    %2458 = vmatpush1.bf16.msra.mxu0 %v1774
    %2459 = vmatprep.subr.bf16.mxu0 0
    %2460 = vmatpush1.bf16.msra.mxu0 %v1775
    %2461 = vmatprep.subr.bf16.mxu0 0
    %2462 = vmatpush1.bf16.msra.mxu0 %v1776
    %2463 = vmatprep.subr.bf16.mxu0 0
    %2464 = vmatpush1.bf16.msra.mxu0 %v1777
    %2465 = vmatprep.subr.bf16.mxu0 0
    %2466 = vmatpush1.bf16.msra.mxu0 %v1778
    %2467 = vmatprep.subr.bf16.mxu0 0
    %2468 = vmatpush1.bf16.msra.mxu0 %v1779
    %2469 = vmatprep.subr.bf16.mxu0 0
    %2470 = vmatpush1.bf16.msra.mxu0 %v1780
    %2471 = vmatprep.subr.bf16.mxu0 0
    %2472 = vmatpush1.bf16.msra.mxu0 %v1781
    %2473 = vmatprep.subr.bf16.mxu0 0
    %2474 = vmatpush1.bf16.msra.mxu0 %v1782
    %2475 = vmatprep.subr.bf16.mxu0 0
    %2476 = vmatpush1.bf16.msra.mxu0 %v1783
    %2477 = vmatprep.mubr.bf16.mxu0 %v367
    %2478 = vmatmul.mubr.bf16.gmra.mrb[0].mxu0 %v366
    %v2479 = vpop.f32.mrb[0].mxu0
    %v2480 = vadd.f32 %v2440, %v2479
    %v2481 = vpop.f32.mrb[0].mxu0
    %v2482 = vpop.f32.mrb[0].mxu0
    %v2483 = vpop.f32.mrb[0].mxu0
    %2484 = vdwg.mxu0
    %2485 = vmatprep.subr.bf16.mxu0 0
    %2486 = vmatpush1.bf16.msra.mxu0 %v1784
    %2487 = vmatprep.subr.bf16.mxu0 0
    %2488 = vmatpush1.bf16.msra.mxu0 %v1785
    %2489 = vmatprep.subr.bf16.mxu0 0
    %2490 = vmatpush1.bf16.msra.mxu0 %v1786
    %2491 = vmatprep.subr.bf16.mxu0 0
    %2492 = vmatpush1.bf16.msra.mxu0 %v1787
    %2493 = vmatprep.subr.bf16.mxu0 0
    %2494 = vmatpush1.bf16.msra.mxu0 %v1788
    %2495 = vmatprep.subr.bf16.mxu0 0
    %2496 = vmatpush1.bf16.msra.mxu0 %v1789
    %2497 = vmatprep.subr.bf16.mxu0 0
    %2498 = vmatpush1.bf16.msra.mxu0 %v1790
    %2499 = vmatprep.subr.bf16.mxu0 0
    %2500 = vmatpush1.bf16.msra.mxu0 %v1791
    %2501 = vmatprep.subr.bf16.mxu0 0
    %2502 = vmatpush1.bf16.msra.mxu0 %v1792
    %2503 = vmatprep.subr.bf16.mxu0 0
    %2504 = vmatpush1.bf16.msra.mxu0 %v1793
    %2505 = vmatprep.subr.bf16.mxu0 0
    %2506 = vmatpush1.bf16.msra.mxu0 %v2003
    %2507 = vmatprep.subr.bf16.mxu0 0
    %2508 = vmatpush1.bf16.msra.mxu0 0
    %2509 = vmatprep.subr.bf16.mxu0 0
    %2510 = vmatpush1.bf16.msra.mxu0 0
    %2511 = vmatprep.subr.bf16.mxu0 0
    %2512 = vmatpush1.bf16.msra.mxu0 0
    %2513 = vmatprep.subr.bf16.mxu0 0
    %2514 = vmatpush1.bf16.msra.mxu0 0
    %2515 = vmatprep.subr.bf16.mxu0 0
    %2516 = vmatpush1.bf16.msra.mxu0 0
    %2517 = vmatprep.mubr.bf16.mxu0 %v1999
    %2518 = vmatmul.mubr.bf16.gmra.mrb[0].mxu0 %v368
    %v2519 = vpop.f32.mrb[0].mxu0
    %v2520 = vadd.f32 %v2480, %v2519
    %v2521 = vpop.f32.mrb[0].mxu0
    %v2522 = vpop.f32.mrb[0].mxu0
    %v2523 = vpop.f32.mrb[0].mxu0
    %2524 = vdwg.mxu0
    %v2525 = vmax.f32 %v2520, 0.0
    %v2526 = vld [vmem:[%s3] sm:$0xff]
    %v2527 = vld [vmem:[%s3 + $0x8] sm:$0xff]
    %v2528 = vld [vmem:[%s4] sm:$0x1]
    %v2530 = vlaneseq
    %v2531 = vshrl.u32 %v2530, 7
    %v2532 = vsub.s32 0, %v2531
    %v2533 = vrot.slane %v2528, %v2532
    %vm2535 = vcmask 130048
    %v2537 = vsel %vm2535, %v2525, 0
    %2539 = vmatprep.subr.mxu0 0.0
    %2540 = vmatpush1.msra.mxu0 %v2526
    %2541 = vmatprep.subr.mxu0 0.0
    %2542 = vmatpush1.msra.mxu0 %v2527
    %2543 = vmatprep.subr.mxu0 0.0
    %2544 = vmatpush1.msra.mxu0 0.0
    %2545 = vmatprep.subr.mxu0 0.0
    %2546 = vmatpush1.msra.mxu0 0.0
    %2547 = vmatprep.subr.mxu0 0.0
    %2548 = vmatpush1.msra.mxu0 0.0
    %2549 = vmatprep.subr.mxu0 0.0
    %2550 = vmatpush1.msra.mxu0 0.0
    %2551 = vmatprep.subr.mxu0 0.0
    %2552 = vmatpush1.msra.mxu0 0.0
    %2553 = vmatprep.subr.mxu0 0.0
    %2554 = vmatpush1.msra.mxu0 0.0
    %2555 = vmatprep.subr.mxu0 0.0
    %2556 = vmatpush1.msra.mxu0 0.0
    %2557 = vmatprep.subr.mxu0 0.0
    %2558 = vmatpush1.msra.mxu0 0.0
    %2559 = vmatprep.subr.mxu0 0.0
    %2560 = vmatpush1.msra.mxu0 0.0
    %2561 = vmatprep.subr.mxu0 0.0
    %2562 = vmatpush1.msra.mxu0 0.0
    %2563 = vmatprep.subr.mxu0 0.0
    %2564 = vmatpush1.msra.mxu0 0.0
    %2565 = vmatprep.subr.mxu0 0.0
    %2566 = vmatpush1.msra.mxu0 0.0
    %2567 = vmatprep.subr.mxu0 0.0
    %2568 = vmatpush1.msra.mxu0 0.0
    %2569 = vmatprep.subr.mxu0 0.0
    %2570 = vmatpush1.msra.mxu0 0.0
    %2571 = vmatprep.subr.mxu0 0.0
    %2572 = vmatpush1.msra.mxu0 0.0
    %2573 = vmatprep.subr.mxu0 0.0
    %2574 = vmatpush1.msra.mxu0 0.0
    %2575 = vmatprep.subr.mxu0 0.0
    %2576 = vmatpush1.msra.mxu0 0.0
    %2577 = vmatprep.subr.mxu0 0.0
    %2578 = vmatpush1.msra.mxu0 0.0
    %2579 = vmatprep.subr.mxu0 0.0
    %2580 = vmatpush1.msra.mxu0 0.0
    %2581 = vmatprep.subr.mxu0 0.0
    %2582 = vmatpush1.msra.mxu0 0.0
    %2583 = vmatprep.subr.mxu0 0.0
    %2584 = vmatpush1.msra.mxu0 0.0
    %2585 = vmatprep.subr.mxu0 0.0
    %2586 = vmatpush1.msra.mxu0 0.0
    %2587 = vmatprep.subr.mxu0 0.0
    %2588 = vmatpush1.msra.mxu0 0.0
    %2589 = vmatprep.subr.mxu0 0.0
    %2590 = vmatpush1.msra.mxu0 0.0
    %2591 = vmatprep.subr.mxu0 0.0
    %2592 = vmatpush1.msra.mxu0 0.0
    %2593 = vmatprep.subr.mxu0 0.0
    %2594 = vmatpush1.msra.mxu0 0.0
    %2595 = vmatprep.subr.mxu0 0.0
    %2596 = vmatpush1.msra.mxu0 0.0
    %2597 = vmatprep.subr.mxu0 0.0
    %2598 = vmatpush1.msra.mxu0 0.0
    %2599 = vmatprep.subr.mxu0 0.0
    %2600 = vmatpush1.msra.mxu0 0.0
    %2601 = vmatprep.subr.mxu0 0.0
    %2602 = vmatpush1.msra.mxu0 0.0
    %2603 = vmatprep.mubr.f32.mxu0 0.0
    %2604 = vmatmul.mubr.f32.gmra.mrb[0].mxu0 %v2537
    %v2605 = vpop.f32.mrb[0].mxu0
    %v2606 = vadd.f32 %v2533, %v2605
    %v2607 = vpop.f32.mrb[0].mxu0
    %2608 = vdwg.mxu0
    %v2609 = vmax.f32 %v2606, 0.0
    %v2610 = vld [vmem:[%s5] sm:$0xff]
    %v2611 = vld [vmem:[%s5 + $0x8] sm:$0xff]
    %v2612 = vld [vmem:[%s6] sm:$0x1]
    %v2614 = vlaneseq
    %v2615 = vshrl.u32 %v2614, 7
    %v2616 = vsub.s32 0, %v2615
    %v2617 = vrot.slane %v2612, %v2616
    %v2620 = vsel %vm2535, %v2609, 0
    %2622 = vmatprep.subr.mxu0 0.0
    %2623 = vmatpush1.msra.mxu0 %v2610
    %2624 = vmatprep.subr.mxu0 0.0
    %2625 = vmatpush1.msra.mxu0 %v2611
    %2626 = vmatprep.subr.mxu0 0.0
    %2627 = vmatpush1.msra.mxu0 0.0
    %2628 = vmatprep.subr.mxu0 0.0
    %2629 = vmatpush1.msra.mxu0 0.0
    %2630 = vmatprep.subr.mxu0 0.0
    %2631 = vmatpush1.msra.mxu0 0.0
    %2632 = vmatprep.subr.mxu0 0.0
    %2633 = vmatpush1.msra.mxu0 0.0
    %2634 = vmatprep.subr.mxu0 0.0
    %2635 = vmatpush1.msra.mxu0 0.0
    %2636 = vmatprep.subr.mxu0 0.0
    %2637 = vmatpush1.msra.mxu0 0.0
    %2638 = vmatprep.subr.mxu0 0.0
    %2639 = vmatpush1.msra.mxu0 0.0
    %2640 = vmatprep.subr.mxu0 0.0
    %2641 = vmatpush1.msra.mxu0 0.0
    %2642 = vmatprep.subr.mxu0 0.0
    %2643 = vmatpush1.msra.mxu0 0.0
    %2644 = vmatprep.subr.mxu0 0.0
    %2645 = vmatpush1.msra.mxu0 0.0
    %2646 = vmatprep.subr.mxu0 0.0
    %2647 = vmatpush1.msra.mxu0 0.0
    %2648 = vmatprep.subr.mxu0 0.0
    %2649 = vmatpush1.msra.mxu0 0.0
    %2650 = vmatprep.subr.mxu0 0.0
    %2651 = vmatpush1.msra.mxu0 0.0
    %2652 = vmatprep.subr.mxu0 0.0
    %2653 = vmatpush1.msra.mxu0 0.0
    %2654 = vmatprep.subr.mxu0 0.0
    %2655 = vmatpush1.msra.mxu0 0.0
    %2656 = vmatprep.subr.mxu0 0.0
    %2657 = vmatpush1.msra.mxu0 0.0
    %2658 = vmatprep.subr.mxu0 0.0
    %2659 = vmatpush1.msra.mxu0 0.0
    %2660 = vmatprep.subr.mxu0 0.0
    %2661 = vmatpush1.msra.mxu0 0.0
    %2662 = vmatprep.subr.mxu0 0.0
    %2663 = vmatpush1.msra.mxu0 0.0
    %2664 = vmatprep.subr.mxu0 0.0
    %2665 = vmatpush1.msra.mxu0 0.0
    %2666 = vmatprep.subr.mxu0 0.0
    %2667 = vmatpush1.msra.mxu0 0.0
    %2668 = vmatprep.subr.mxu0 0.0
    %2669 = vmatpush1.msra.mxu0 0.0
    %2670 = vmatprep.subr.mxu0 0.0
    %2671 = vmatpush1.msra.mxu0 0.0
    %2672 = vmatprep.subr.mxu0 0.0
    %2673 = vmatpush1.msra.mxu0 0.0
    %2674 = vmatprep.subr.mxu0 0.0
    %2675 = vmatpush1.msra.mxu0 0.0
    %2676 = vmatprep.subr.mxu0 0.0
    %2677 = vmatpush1.msra.mxu0 0.0
    %2678 = vmatprep.subr.mxu0 0.0
    %2679 = vmatpush1.msra.mxu0 0.0
    %2680 = vmatprep.subr.mxu0 0.0
    %2681 = vmatpush1.msra.mxu0 0.0
    %2682 = vmatprep.subr.mxu0 0.0
    %2683 = vmatpush1.msra.mxu0 0.0
    %2684 = vmatprep.subr.mxu0 0.0
    %2685 = vmatpush1.msra.mxu0 0.0
    %2686 = vmatprep.mubr.f32.mxu0 0.0
    %2687 = vmatmul.mubr.f32.gmra.mrb[0].mxu0 %v2620
    %v2688 = vpop.f32.mrb[0].mxu0
    %v2689 = vadd.f32 %v2617, %v2688
    %v2690 = vpop.f32.mrb[0].mxu0
    %2691 = vdwg.mxu0
    %vm2692 = vcmask 31744
    %v2693 = vsel %vm2692, %v2689, -inf
    %2694 = vmax.xlane.f32.xlu0 %v2693
    %v2695 = vpop.xlane.xlu0 %2694
    %v2696 = vsub.f32 %v2689, %v2695
    %v2697 = vmul.f32 %v2696, 1.442695
    %v2698 = vpow.pop %v2697
    %v2699 = vsel %vm2692, %v2698, 0.0
    %2700 = vadd.xlane.f32.xlu0 %v2699
    %v2701 = vpop.xlane.xlu0 %2700
    %v2702 = vrcp.pop %v2701
    %v2703 = vmul.f32 %v2698, %v2702
    %2704 = vst.msk [vmem:[#allocation2] sm:$0xff] %vm2692, %v2703
    // Predicated region
    $region30: #{policy_forward.1} parent=1 // pred_check
      _
    $region31: #{policy_forward.1} parent=1 // pred_check_branch
      %2706 = sbr.rel (0) target = $region33
    $region32: #{policy_forward.1} parent=1 // pred_region
      %s2708 = ssub.s32 128, 32
      %2709 = vsyncadd [#allocation3], %s2708
      %s2710 = sshll.u32 [#allocation2], 4
      %s2711 = int_to_ptr.vmem [resolvable:$true] %s2710
      %2716 = dma.vmem_to_hbm [thread:$0]  %s2711, 32, %s7, [#allocation3], 32, 32, 2
    $region33: #{policy_forward.1} parent=1 // pred_fallthru
      _
    // Predicated region
    $region34: #{policy_forward.1} parent=1 // pred_check
      _
    $region35: #{policy_forward.1} parent=1 // pred_check_branch
      %2718 = sbr.rel (0) target = $region37
    $region36: #{policy_forward.1} parent=1 // pred_region
      %2719 = dma.done [#allocation3], 128
    $region37: #{policy_forward.1} parent=1 // pred_fallthru
      _
    %2720 = vsyncpa [#allocation3], 1

</llo_original>
